<compile_context>
chip_gen: v7x
topology: tpu7x:2x2x1
jax: 0.10.0
libtpu: 0.0.40
codegen_flags: <defaults>
</compile_context>

<pallas_src>
import functools
import math

import jax
import jax.numpy as jnp
from jax import lax
from jax.experimental import pallas as pl
from jax.experimental.pallas import tpu as pltpu


def _round_up(x, m):
    return (x + m - 1) // m * m


# ------------------------------ fused kernel --------------------------------

def _bottle2neck_kernel(
    x_ref,            # (bt, cin, hw)       f32   NCHW image(s), spatial flattened
    w1t_ref,          # (c1p, cin)          bf16  conv1 weight, channel-major (transposed)
    s1_ref, b1_ref,   # (c1p, 1)            f32   folded BN1 scale / bias
    wb_ref,           # (nums, wg, 9*wg)    bf16  3x3 branch weights, taps in contraction dim
    sb_ref, bb_ref,   # (nums, wg, 1)       f32   folded branch BN scale / bias
    w3t_ref,          # (cout, c1p)         bf16  conv3 weight, channel-major (transposed)
    s3_ref, b3_ref,   # (cout, 1)           f32   folded BN3 scale / bias
    o_ref,            # (bt, cout, hw)      f32   output, NCHW layout
    *, H, W, wg, nums, scale_groups,
):
    hw = H * W
    bt = x_ref.shape[0]

    # ---- hoisted spatial wrap masks (built once per grid step, full (wg,hw) f32) ----
    lane = lax.broadcasted_iota(jnp.int32, (wg, hw), 1)      # flat position m = h*W + w
    col = lane % W
    f1 = jnp.float32(1.0)
    f0 = jnp.float32(0.0)
    mw_n = jnp.where(col >= 1, f1, f0)                       # tap reads w-1: valid if w >= 1
    mw_p = jnp.where(col <= W - 2, f1, f0)                   # tap reads w+1: valid if w <= W-2
    mh_n = jnp.where(lane >= W, f1, f0)                      # tap reads h-1: valid if h >= 1
    mh_p = jnp.where(lane < (H - 1) * W, f1, f0)             # tap reads h+1: valid if h <= H-2

    for j in range(bt):                                      # unrolled at trace time
        # ---- conv1 (1x1) + BN1 + ReLU, channel-major: (c1p,cin)@(cin,hw) -> (c1p,hw) ----
        xb = x_ref[j].astype(jnp.bfloat16)                   # bf16 cast, no transpose, no pad
        y1 = jnp.dot(w1t_ref[...], xb, preferred_element_type=jnp.float32)
        out1 = jnp.maximum(y1 * s1_ref[...] + b1_ref[...], 0.0)   # (c1p, hw) f32

        # width groups are 8-sublane-aligned slabs of out1 (padded rows are exactly zero)
        groups = [out1[i * wg:(i + 1) * wg, :] for i in range(scale_groups)]

        # ---- sequential Res2Net branches: one K=9*wg matmul per branch ----------------
        sp = None
        for i in range(nums):
            sp_in = groups[i] if i == 0 else sp + groups[i]          # stype == 'normal'

            # pre-shifted, wrap-masked horizontal copies (dw = -1, 0, +1): XLU lane rolls
            h_m1 = mw_n * pltpu.roll(sp_in, shift=1, axis=1)         # reads column w-1
            h_p1 = mw_p * pltpu.roll(sp_in, shift=hw - 1, axis=1)    # reads column w+1
            hcop = (h_m1, sp_in, h_p1)

            taps = []
            for dh, mask_h in ((-1, mh_n), (0, None), (1, mh_p)):
                for dw in (-1, 0, 1):
                    t = hcop[dw + 1]
                    if dh != 0:                                      # vertical shift = lane roll by W
                        t = mask_h * pltpu.roll(t, shift=(-dh * W) % hw, axis=1)
                    taps.append(t)

            # im2col slab: 9 taps stacked along the contraction (sublane) dim
            im2col = jnp.concatenate(taps, axis=0).astype(jnp.bfloat16)   # (9*wg, hw)
            y = jnp.dot(wb_ref[i], im2col, preferred_element_type=jnp.float32)  # (wg, hw)
            sp = jnp.maximum(y * sb_ref[i] + bb_ref[i], 0.0)         # BN + ReLU (padded rows stay 0)
            groups[i] = sp

        # last width-group passes through untouched (scale != 1, stype == 'normal')
        cat = jnp.concatenate(groups, axis=0).astype(jnp.bfloat16)   # (c1p, hw)

        # ---- conv3 (1x1) + BN3 + residual + ReLU: (cout,c1p)@(c1p,hw) -> NCHW directly ----
        y3 = jnp.dot(w3t_ref[...], cat, preferred_element_type=jnp.float32)     # (cout, hw)
        y3 = y3 * s3_ref[...] + b3_ref[...] + x_ref[j]               # f32 residual add
        o_ref[j] = jnp.maximum(y3, 0.0)                              # lane-dense NCHW store


# --------------------------- one-time param prep -----------------------------

def prepare_params(params, *, inplanes, width, scale_groups, nums, eps=1e-5):
    """Fold BN, pad width groups to 8 sublanes, repack 3x3 taps into the contraction dim,
    pre-transpose 1x1 convs to channel-major, cast MXU operands to bf16."""
    wg = _round_up(width, 8)                 # per-group sublane stride (f32 tile = 8 sublanes)
    c1p = wg * scale_groups
    cout = params['w3'].shape[1]

    def fold(bn):
        g, b, m, v = bn
        s = g / jnp.sqrt(v + eps)
        return s.astype(jnp.float32), (b - m * s).astype(jnp.float32)

    # conv1 weight / bn1 (channel-major, one 8-sublane slot per width group)
    w1t = jnp.zeros((c1p, inplanes), jnp.float32)
    s1p = jnp.zeros((c1p, 1), jnp.float32)
    b1p = jnp.zeros((c1p, 1), jnp.float32)
    s1, b1 = fold(params['bn1'])
    for i in range(scale_groups):
        src = slice(i * width, (i + 1) * width)
        dst = slice(i * wg, i * wg + width)
        w1t = w1t.at[dst, :].set(params['w1'][:, src].T)
        s1p = s1p.at[dst, 0].set(s1[src])
        b1p = b1p.at[dst, 0].set(b1[src])

    # 3x3 branch weights: taps live in the contraction dim -> (nums, wg, 9*wg)
    wbp = jnp.zeros((nums, wg, 9 * wg), jnp.float32)
    sbp = jnp.zeros((nums, wg, 1), jnp.float32)
    bbp = jnp.zeros((nums, wg, 1), jnp.float32)
    for i in range(nums):
        w = params['w3x3'][i]                                     # (3, 3, ci, co) HWIO
        for kh in range(3):
            for kw in range(3):
                k = kh * 3 + kw
                # wbp[i, co, k*wg + ci] = w[kh, kw, ci, co]
                wbp = wbp.at[i, :width, k * wg:k * wg + width].set(w[kh, kw].T)
        si, bi = fold(params['bns'][i])
        sbp = sbp.at[i, :width, 0].set(si)
        bbp = bbp.at[i, :width, 0].set(bi)

    # conv3 weight (channel-major, transposed), grouped column layout
    w3t = jnp.zeros((cout, c1p), jnp.float32)
    for i in range(scale_groups):
        w3t = w3t.at[:, i * wg:i * wg + width].set(
            params['w3'][i * width:(i + 1) * width, :].T)
    s3, b3 = fold(params['bn3'])

    arrays = (
        w1t.astype(jnp.bfloat16), s1p, b1p,
        wbp.astype(jnp.bfloat16), sbp, bbp,
        w3t.astype(jnp.bfloat16),
        s3.reshape(cout, 1), b3.reshape(cout, 1),
    )
    cfg = dict(width=width, wg=wg, c1p=c1p, cin=inplanes,
               cout=cout, scale_groups=scale_groups, nums=nums)
    return arrays, cfg


# --------------------------------- wrapper -----------------------------------

def bottle2neck_forward(x_nchw, prep_arrays, cfg, *, batch_block=1):
    n, cin, hsz, wsz = x_nchw.shape
    assert cin == cfg['cin']
    # Identity residual: valid because inplanes == planes*4 and downsample is None.
    assert cfg['cout'] == cin, "identity residual requires inplanes == planes * 4"
    # TODO(synk): downsample projection, stride>1, dilation>1 and stype='stage' (AvgPool path)
    #             are not implemented (not used by this configuration).
    hw = hsz * wsz
    assert hw % 128 == 0, "lane-roll tap path expects H*W to be a multiple of 128"
    # TODO(synk): large H*W (real ResNet stages) needs a spatial grid axis with halo rows and
    #             a re-derived VMEM budget (v7x has only 64 MiB) -- not needed at this size.
    assert n % batch_block == 0
    # batch_block=1 keeps grid=(n,) so both v7x TCs get work; on single-TC v5e/v6e a larger
    # batch_block amortizes the (now small) per-grid-step fixed work.

    wg, c1p, cout = cfg['wg'], cfg['c1p'], cfg['cout']
    nums, scale_groups = cfg['nums'], cfg['scale_groups']

    x3 = x_nchw.reshape(n, cin, hw).astype(jnp.float32)       # free reshape (NCHW)

    kernel = functools.partial(
        _bottle2neck_kernel, H=hsz, W=wsz, wg=wg, nums=nums, scale_groups=scale_groups)

    flops = n * (2 * hw * cin * c1p
                 + nums * 2 * hw * (9 * wg) * wg
                 + 2 * hw * c1p * cout)
    bytes_accessed = (int(x3.size) * 4 + n * cout * hw * 4
                      + sum(int(a.size) * int(a.dtype.itemsize) for a in prep_arrays))

    grid_spec = pltpu.PrefetchScalarGridSpec(
        num_scalar_prefetch=0,
        grid=(n // batch_block,),
        in_specs=[
            pl.BlockSpec((batch_block, cin, hw), lambda b: (b, 0, 0)),   # x
            pl.BlockSpec((c1p, cin), lambda b: (0, 0)),                  # w1 (transposed)
            pl.BlockSpec((c1p, 1), lambda b: (0, 0)),                    # bn1 scale
            pl.BlockSpec((c1p, 1), lambda b: (0, 0)),                    # bn1 bias
            pl.BlockSpec((nums, wg, 9 * wg), lambda b: (0, 0, 0)),       # 3x3 weights (repacked)
            pl.BlockSpec((nums, wg, 1), lambda b: (0, 0, 0)),            # branch bn scale
            pl.BlockSpec((nums, wg, 1), lambda b: (0, 0, 0)),            # branch bn bias
            pl.BlockSpec((cout, c1p), lambda b: (0, 0)),                 # w3 (transposed)
            pl.BlockSpec((cout, 1), lambda b: (0, 0)),                   # bn3 scale
            pl.BlockSpec((cout, 1), lambda b: (0, 0)),                   # bn3 bias
        ],
        out_specs=pl.BlockSpec((batch_block, cout, hw), lambda b: (b, 0, 0)),
    )

    y = pl.pallas_call(
        kernel,
        out_shape=jax.ShapeDtypeStruct((n, cout, hw), jnp.float32),
        grid_spec=grid_spec,
        compiler_params=pltpu.CompilerParams(
            dimension_semantics=("parallel",)),
        cost_estimate=pl.CostEstimate(flops=flops, transcendentals=0,
                                      bytes_accessed=bytes_accessed),
    )(x3, *prep_arrays)

    return y.reshape(n, cout, hsz, wsz)                        # free reshape (NCHW)


# ------------------------- pure-JAX reference check --------------------------

def reference_forward(x_nchw, params, *, width, scale_groups, nums):
    x = jnp.transpose(x_nchw, (0, 2, 3, 1)).astype(jnp.float32)
    dn = ('NHWC', 'HWIO', 'NHWC')

    def conv1x1(v, w_io):
        w4 = w_io.reshape(1, 1, *w_io.shape)
        return lax.conv_general_dilated(v, w4, (1, 1), 'VALID', dimension_numbers=dn)

    def bn(v, p):
        g, b, m, var = p
        return (v - m) / jnp.sqrt(var + 1e-5) * g + b

    out = jax.nn.relu(bn(conv1x1(x, params['w1']), params['bn1']))
    spx = [out[..., i * width:(i + 1) * width] for i in range(scale_groups)]
    outs = []
    sp = None
    for i in range(nums):
        sp = spx[i] if i == 0 else sp + spx[i]
        sp = lax.conv_general_dilated(sp, params['w3x3'][i], (1, 1), 'SAME',
                                      dimension_numbers=dn)
        sp = jax.nn.relu(bn(sp, params['bns'][i]))
        outs.append(sp)
    if scale_groups != 1:
        outs.append(spx[nums])
    outc = jnp.concatenate(outs, axis=-1)
    y = jax.nn.relu(bn(conv1x1(outc, params['w3']), params['bn3']) + x)
    return jnp.transpose(y, (0, 3, 1, 2))


# -------------------------------- parameters ---------------------------------

def init_params(key, inplanes, planes, base_width=26, scale_groups=4):
    width = int(math.floor(planes * (base_width / 64.0)))
    nums = 1 if scale_groups == 1 else scale_groups - 1
    outp = planes * 4  # expansion = 4
    keys = jax.random.split(key, 16)

    def bn_params(k, c):
        k1, k2, k3, k4 = jax.random.split(k, 4)
        gamma = 1.0 + 0.1 * jax.random.normal(k1, (c,), jnp.float32)
        beta = 0.1 * jax.random.normal(k2, (c,), jnp.float32)
        mean = 0.1 * jax.random.normal(k3, (c,), jnp.float32)
        var = 0.5 + jax.random.uniform(k4, (c,), jnp.float32)
        return (gamma, beta, mean, var)

    params = {
        'w1': 0.1 * jax.random.normal(keys[0], (inplanes, width * scale_groups), jnp.float32),
        'bn1': bn_params(keys[1], width * scale_groups),
        'w3x3': [0.1 * jax.random.normal(keys[2 + i], (3, 3, width, width), jnp.float32)
                 for i in range(nums)],
        'bns': [bn_params(keys[6 + i], width) for i in range(nums)],
        'w3': 0.1 * jax.random.normal(keys[10], (width * scale_groups, outp), jnp.float32),
        'bn3': bn_params(keys[11], outp),
    }
    return params, width, nums


# ----------------------------------- main -------------------------------------

if __name__ == "__main__":
    # Bottle2neck(inplanes=64, planes=16, stride=1, dilation_=1, downsample=None,
    #             baseWidth=26, scale=4, stype='normal')
    inplanes, planes, scale_groups = 64, 16, 4
    key = jax.random.PRNGKey(0)
    kx, kp = jax.random.split(key)
    params, width, nums = init_params(kp, inplanes, planes, scale_groups=scale_groups)

    x = jax.random.normal(kx, (2, inplanes, 16, 16), jnp.float32)   # NCHW, like PyTorch

    prep_arrays, cfg = prepare_params(params, inplanes=inplanes, width=width,
                                      scale_groups=scale_groups, nums=nums)

    y = bottle2neck_forward(x, prep_arrays, cfg)
    y = jax.block_until_ready(y)

    assert y.shape == (2, planes * 4, 16, 16), y.shape
    assert bool(jnp.all(jnp.isfinite(y)))

    y_ref = reference_forward(x, params, width=width, scale_groups=scale_groups, nums=nums)
    y_ref = jax.block_until_ready(y_ref)
    max_err = float(jnp.max(jnp.abs(y - y_ref)))
    assert max_err < 5e-2, f"max abs err vs reference: {max_err}"

    print("KERNEL_OK")
</pallas_src>

<mosaic_0001>
module attributes {stable_mosaic.version = 11 : i64} {
  func.func @_bottle2neck_kernel(%arg0: i32, %arg1: memref<1x64x256xf32, #tpu.memory_space<vmem>>, %arg2: memref<32x64xbf16, #tpu.memory_space<vmem>>, %arg3: memref<32x1xf32, #tpu.memory_space<vmem>>, %arg4: memref<32x1xf32, #tpu.memory_space<vmem>>, %arg5: memref<3x8x72xbf16, #tpu.memory_space<vmem>>, %arg6: memref<3x8x1xf32, #tpu.memory_space<vmem>>, %arg7: memref<3x8x1xf32, #tpu.memory_space<vmem>>, %arg8: memref<64x32xbf16, #tpu.memory_space<vmem>>, %arg9: memref<64x1xf32, #tpu.memory_space<vmem>>, %arg10: memref<64x1xf32, #tpu.memory_space<vmem>>, %arg11: memref<1x64x256xf32, #tpu.memory_space<vmem>>) attributes {dimension_semantics = [#tpu.dimension_semantics<parallel>], iteration_bounds = array<i64: 2>, scalar_prefetch = 0 : i64, scratch_operands = 0 : i64, tpu.core_type = #tpu.core_type<tc>, window_params = [{transform_indices = @transform_0, window_bounds = array<i64: 1, 64, 256>}, {pipeline_mode = #tpu.pipeline_mode<synchronous>, transform_indices = @transform_1, window_bounds = array<i64: 32, 64>}, {pipeline_mode = #tpu.pipeline_mode<synchronous>, transform_indices = @transform_2, window_bounds = array<i64: 32, 1>}, {pipeline_mode = #tpu.pipeline_mode<synchronous>, transform_indices = @transform_3, window_bounds = array<i64: 32, 1>}, {pipeline_mode = #tpu.pipeline_mode<synchronous>, transform_indices = @transform_4, window_bounds = array<i64: 3, 8, 72>}, {pipeline_mode = #tpu.pipeline_mode<synchronous>, transform_indices = @transform_5, window_bounds = array<i64: 3, 8, 1>}, {pipeline_mode = #tpu.pipeline_mode<synchronous>, transform_indices = @transform_6, window_bounds = array<i64: 3, 8, 1>}, {pipeline_mode = #tpu.pipeline_mode<synchronous>, transform_indices = @transform_7, window_bounds = array<i64: 64, 32>}, {pipeline_mode = #tpu.pipeline_mode<synchronous>, transform_indices = @transform_8, window_bounds = array<i64: 64, 1>}, {pipeline_mode = #tpu.pipeline_mode<synchronous>, transform_indices = @transform_9, window_bounds = array<i64: 64, 1>}, {transform_indices = @transform_10, window_bounds = array<i64: 1, 64, 256>}]} {
    %0 = tpu.iota {dimensions = array<i32: 1>} : vector<8x256xi32>
    %c16_i32 = arith.constant 16 : i32
    %c0_i32 = arith.constant 0 : i32
    %1 = arith.cmpi eq, %c16_i32, %c0_i32 : i32
    %c1_i32 = arith.constant 1 : i32
    %2 = arith.select %1, %c1_i32, %c16_i32 : i32
    %3 = vector.broadcast %2 : i32 to vector<8x256xi32>
    %4 = arith.remsi %0, %3 : vector<8x256xi32>
    %c0_i32_0 = arith.constant 0 : i32
    %5 = vector.broadcast %c0_i32_0 : i32 to vector<8x256xi32>
    %6 = arith.cmpi ne, %4, %5 : vector<8x256xi32>
    %c0_i32_1 = arith.constant 0 : i32
    %7 = vector.broadcast %c0_i32_1 : i32 to vector<8x256xi32>
    %8 = arith.cmpi slt, %4, %7 : vector<8x256xi32>
    %c0_i32_2 = arith.constant 0 : i32
    %9 = arith.cmpi slt, %2, %c0_i32_2 : i32
    %10 = vector.broadcast %9 : i1 to vector<8x256xi1>
    %11 = vector.broadcast %10 : vector<8x256xi1> to vector<8x256xi1>
    %12 = arith.xori %8, %11 : vector<8x256xi1>
    %13 = arith.andi %12, %6 : vector<8x256xi1>
    %14 = vector.broadcast %2 : i32 to vector<8x256xi32>
    %15 = arith.addi %4, %14 : vector<8x256xi32>
    %16 = arith.select %13, %15, %4 : vector<8x256xi1>, vector<8x256xi32>
    %c1_i32_3 = arith.constant 1 : i32
    %17 = vector.broadcast %c1_i32_3 : i32 to vector<8x256xi32>
    %18 = arith.cmpi sge, %16, %17 : vector<8x256xi32>
    %cst = arith.constant 1.000000e+00 : f32
    %cst_4 = arith.constant 0.000000e+00 : f32
    %19 = vector.broadcast %cst : f32 to vector<8x256xf32>
    %20 = vector.broadcast %cst_4 : f32 to vector<8x256xf32>
    %21 = arith.select %18, %19, %20 : vector<8x256xi1>, vector<8x256xf32>
    %c14_i32 = arith.constant 14 : i32
    %22 = vector.broadcast %c14_i32 : i32 to vector<8x256xi32>
    %23 = arith.cmpi sle, %16, %22 : vector<8x256xi32>
    %cst_5 = arith.constant 1.000000e+00 : f32
    %cst_6 = arith.constant 0.000000e+00 : f32
    %24 = vector.broadcast %cst_5 : f32 to vector<8x256xf32>
    %25 = vector.broadcast %cst_6 : f32 to vector<8x256xf32>
    %26 = arith.select %23, %24, %25 : vector<8x256xi1>, vector<8x256xf32>
    %c16_i32_7 = arith.constant 16 : i32
    %27 = vector.broadcast %c16_i32_7 : i32 to vector<8x256xi32>
    %28 = arith.cmpi sge, %0, %27 : vector<8x256xi32>
    %cst_8 = arith.constant 1.000000e+00 : f32
    %cst_9 = arith.constant 0.000000e+00 : f32
    %29 = vector.broadcast %cst_8 : f32 to vector<8x256xf32>
    %30 = vector.broadcast %cst_9 : f32 to vector<8x256xf32>
    %31 = arith.select %28, %29, %30 : vector<8x256xi1>, vector<8x256xf32>
    %c240_i32 = arith.constant 240 : i32
    %32 = vector.broadcast %c240_i32 : i32 to vector<8x256xi32>
    %33 = arith.cmpi slt, %0, %32 : vector<8x256xi32>
    %cst_10 = arith.constant 1.000000e+00 : f32
    %cst_11 = arith.constant 0.000000e+00 : f32
    %34 = vector.broadcast %cst_10 : f32 to vector<8x256xf32>
    %35 = vector.broadcast %cst_11 : f32 to vector<8x256xf32>
    %36 = arith.select %33, %34, %35 : vector<8x256xi1>, vector<8x256xf32>
    %c0 = arith.constant 0 : index
    %c0_12 = arith.constant 0 : index
    %c0_13 = arith.constant 0 : index
    %37 = vector.load %arg1[%c0, %c0_12, %c0_13] : memref<1x64x256xf32, #tpu.memory_space<vmem>>, vector<1x64x256xf32>
    %38 = vector.shape_cast %37 : vector<1x64x256xf32> to vector<64x256xf32>
    %39 = arith.truncf %38 : vector<64x256xf32> to vector<64x256xbf16>
    %c0_14 = arith.constant 0 : index
    %c0_15 = arith.constant 0 : index
    %40 = vector.load %arg2[%c0_14, %c0_15] : memref<32x64xbf16, #tpu.memory_space<vmem>>, vector<32x64xbf16>
    %cst_16 = arith.constant dense<0.000000e+00> : vector<32x256xf32>
    %41 = tpu.matmul %40, %39, %cst_16 {dimension_numbers = #tpu.dot_dimension_numbers<[1], [0], [0], [1], [0, 0, 1, 1], [], []>} : vector<32x64xbf16>, vector<64x256xbf16>, vector<32x256xf32> -> vector<32x256xf32>
    %c0_17 = arith.constant 0 : index
    %c0_18 = arith.constant 0 : index
    %42 = vector.load %arg3[%c0_17, %c0_18] : memref<32x1xf32, #tpu.memory_space<vmem>>, vector<32x1xf32>
    %43 = vector.broadcast %42 : vector<32x1xf32> to vector<32x256xf32>
    %44 = arith.mulf %41, %43 : vector<32x256xf32>
    %c0_19 = arith.constant 0 : index
    %c0_20 = arith.constant 0 : index
    %45 = vector.load %arg4[%c0_19, %c0_20] : memref<32x1xf32, #tpu.memory_space<vmem>>, vector<32x1xf32>
    %46 = vector.broadcast %45 : vector<32x1xf32> to vector<32x256xf32>
    %47 = arith.addf %44, %46 : vector<32x256xf32>
    %cst_21 = arith.constant 0.000000e+00 : f32
    %48 = vector.broadcast %cst_21 : f32 to vector<32x256xf32>
    %49 = arith.maximumf %47, %48 : vector<32x256xf32>
    %50 = vector.extract_strided_slice %49 {offsets = [0, 0], sizes = [8, 256], strides = [1, 1]} : vector<32x256xf32> to vector<8x256xf32>
    %51 = vector.extract_strided_slice %49 {offsets = [8, 0], sizes = [8, 256], strides = [1, 1]} : vector<32x256xf32> to vector<8x256xf32>
    %52 = vector.extract_strided_slice %49 {offsets = [16, 0], sizes = [8, 256], strides = [1, 1]} : vector<32x256xf32> to vector<8x256xf32>
    %53 = vector.extract_strided_slice %49 {offsets = [24, 0], sizes = [8, 256], strides = [1, 1]} : vector<32x256xf32> to vector<8x256xf32>
    %c1_i32_22 = arith.constant 1 : i32
    %54 = tpu.dynamic_rotate %50 by %c1_i32_22 dim 1 : vector<8x256xf32>, i32 -> vector<8x256xf32>
    %55 = arith.mulf %21, %54 : vector<8x256xf32>
    %c255_i32 = arith.constant 255 : i32
    %56 = tpu.dynamic_rotate %50 by %c255_i32 dim 1 : vector<8x256xf32>, i32 -> vector<8x256xf32>
    %57 = arith.mulf %26, %56 : vector<8x256xf32>
    %c16_i32_23 = arith.constant 16 : i32
    %58 = tpu.dynamic_rotate %55 by %c16_i32_23 dim 1 : vector<8x256xf32>, i32 -> vector<8x256xf32>
    %59 = arith.mulf %31, %58 : vector<8x256xf32>
    %c16_i32_24 = arith.constant 16 : i32
    %60 = tpu.dynamic_rotate %50 by %c16_i32_24 dim 1 : vector<8x256xf32>, i32 -> vector<8x256xf32>
    %61 = arith.mulf %31, %60 : vector<8x256xf32>
    %c16_i32_25 = arith.constant 16 : i32
    %62 = tpu.dynamic_rotate %57 by %c16_i32_25 dim 1 : vector<8x256xf32>, i32 -> vector<8x256xf32>
    %63 = arith.mulf %31, %62 : vector<8x256xf32>
    %c240_i32_26 = arith.constant 240 : i32
    %64 = tpu.dynamic_rotate %55 by %c240_i32_26 dim 1 : vector<8x256xf32>, i32 -> vector<8x256xf32>
    %65 = arith.mulf %36, %64 : vector<8x256xf32>
    %c240_i32_27 = arith.constant 240 : i32
    %66 = tpu.dynamic_rotate %50 by %c240_i32_27 dim 1 : vector<8x256xf32>, i32 -> vector<8x256xf32>
    %67 = arith.mulf %36, %66 : vector<8x256xf32>
    %c240_i32_28 = arith.constant 240 : i32
    %68 = tpu.dynamic_rotate %57 by %c240_i32_28 dim 1 : vector<8x256xf32>, i32 -> vector<8x256xf32>
    %69 = arith.mulf %36, %68 : vector<8x256xf32>
    %70 = tpu.concatenate %59, %61, %63, %55, %50, %57, %65, %67, %69 in 0 : vector<8x256xf32>, vector<8x256xf32>, vector<8x256xf32>, vector<8x256xf32>, vector<8x256xf32>, vector<8x256xf32>, vector<8x256xf32>, vector<8x256xf32>, vector<8x256xf32> -> vector<72x256xf32>
    %71 = arith.truncf %70 : vector<72x256xf32> to vector<72x256xbf16>
    %c0_29 = arith.constant 0 : index
    %c0_30 = arith.constant 0 : index
    %c0_31 = arith.constant 0 : index
    %72 = vector.load %arg5[%c0_29, %c0_30, %c0_31] : memref<3x8x72xbf16, #tpu.memory_space<vmem>>, vector<1x8x72xbf16>
    %73 = vector.shape_cast %72 : vector<1x8x72xbf16> to vector<8x72xbf16>
    %cst_32 = arith.constant dense<0.000000e+00> : vector<8x256xf32>
    %74 = tpu.matmul %73, %71, %cst_32 {dimension_numbers = #tpu.dot_dimension_numbers<[1], [0], [0], [1], [0, 0, 1, 1], [], []>} : vector<8x72xbf16>, vector<72x256xbf16>, vector<8x256xf32> -> vector<8x256xf32>
    %c0_33 = arith.constant 0 : index
    %c0_34 = arith.constant 0 : index
    %c0_35 = arith.constant 0 : index
    %75 = vector.load %arg6[%c0_33, %c0_34, %c0_35] : memref<3x8x1xf32, #tpu.memory_space<vmem>>, vector<1x8x1xf32>
    %76 = vector.shape_cast %75 : vector<1x8x1xf32> to vector<8x1xf32>
    %77 = vector.broadcast %76 : vector<8x1xf32> to vector<8x256xf32>
    %78 = arith.mulf %74, %77 : vector<8x256xf32>
    %c0_36 = arith.constant 0 : index
    %c0_37 = arith.constant 0 : index
    %c0_38 = arith.constant 0 : index
    %79 = vector.load %arg7[%c0_36, %c0_37, %c0_38] : memref<3x8x1xf32, #tpu.memory_space<vmem>>, vector<1x8x1xf32>
    %80 = vector.shape_cast %79 : vector<1x8x1xf32> to vector<8x1xf32>
    %81 = vector.broadcast %80 : vector<8x1xf32> to vector<8x256xf32>
    %82 = arith.addf %78, %81 : vector<8x256xf32>
    %cst_39 = arith.constant 0.000000e+00 : f32
    %83 = vector.broadcast %cst_39 : f32 to vector<8x256xf32>
    %84 = arith.maximumf %82, %83 : vector<8x256xf32>
    %85 = arith.addf %84, %51 : vector<8x256xf32>
    %c1_i32_40 = arith.constant 1 : i32
    %86 = tpu.dynamic_rotate %85 by %c1_i32_40 dim 1 : vector<8x256xf32>, i32 -> vector<8x256xf32>
    %87 = arith.mulf %21, %86 : vector<8x256xf32>
    %c255_i32_41 = arith.constant 255 : i32
    %88 = tpu.dynamic_rotate %85 by %c255_i32_41 dim 1 : vector<8x256xf32>, i32 -> vector<8x256xf32>
    %89 = arith.mulf %26, %88 : vector<8x256xf32>
    %c16_i32_42 = arith.constant 16 : i32
    %90 = tpu.dynamic_rotate %87 by %c16_i32_42 dim 1 : vector<8x256xf32>, i32 -> vector<8x256xf32>
    %91 = arith.mulf %31, %90 : vector<8x256xf32>
    %c16_i32_43 = arith.constant 16 : i32
    %92 = tpu.dynamic_rotate %85 by %c16_i32_43 dim 1 : vector<8x256xf32>, i32 -> vector<8x256xf32>
    %93 = arith.mulf %31, %92 : vector<8x256xf32>
    %c16_i32_44 = arith.constant 16 : i32
    %94 = tpu.dynamic_rotate %89 by %c16_i32_44 dim 1 : vector<8x256xf32>, i32 -> vector<8x256xf32>
    %95 = arith.mulf %31, %94 : vector<8x256xf32>
    %c240_i32_45 = arith.constant 240 : i32
    %96 = tpu.dynamic_rotate %87 by %c240_i32_45 dim 1 : vector<8x256xf32>, i32 -> vector<8x256xf32>
    %97 = arith.mulf %36, %96 : vector<8x256xf32>
    %c240_i32_46 = arith.constant 240 : i32
    %98 = tpu.dynamic_rotate %85 by %c240_i32_46 dim 1 : vector<8x256xf32>, i32 -> vector<8x256xf32>
    %99 = arith.mulf %36, %98 : vector<8x256xf32>
    %c240_i32_47 = arith.constant 240 : i32
    %100 = tpu.dynamic_rotate %89 by %c240_i32_47 dim 1 : vector<8x256xf32>, i32 -> vector<8x256xf32>
    %101 = arith.mulf %36, %100 : vector<8x256xf32>
    %102 = tpu.concatenate %91, %93, %95, %87, %85, %89, %97, %99, %101 in 0 : vector<8x256xf32>, vector<8x256xf32>, vector<8x256xf32>, vector<8x256xf32>, vector<8x256xf32>, vector<8x256xf32>, vector<8x256xf32>, vector<8x256xf32>, vector<8x256xf32> -> vector<72x256xf32>
    %103 = arith.truncf %102 : vector<72x256xf32> to vector<72x256xbf16>
    %c1 = arith.constant 1 : index
    %c0_48 = arith.constant 0 : index
    %c0_49 = arith.constant 0 : index
    %104 = vector.load %arg5[%c1, %c0_48, %c0_49] : memref<3x8x72xbf16, #tpu.memory_space<vmem>>, vector<1x8x72xbf16>
    %105 = vector.shape_cast %104 : vector<1x8x72xbf16> to vector<8x72xbf16>
    %cst_50 = arith.constant dense<0.000000e+00> : vector<8x256xf32>
    %106 = tpu.matmul %105, %103, %cst_50 {dimension_numbers = #tpu.dot_dimension_numbers<[1], [0], [0], [1], [0, 0, 1, 1], [], []>} : vector<8x72xbf16>, vector<72x256xbf16>, vector<8x256xf32> -> vector<8x256xf32>
    %c1_51 = arith.constant 1 : index
    %c0_52 = arith.constant 0 : index
    %c0_53 = arith.constant 0 : index
    %107 = vector.load %arg6[%c1_51, %c0_52, %c0_53] : memref<3x8x1xf32, #tpu.memory_space<vmem>>, vector<1x8x1xf32>
    %108 = vector.shape_cast %107 : vector<1x8x1xf32> to vector<8x1xf32>
    %109 = vector.broadcast %108 : vector<8x1xf32> to vector<8x256xf32>
    %110 = arith.mulf %106, %109 : vector<8x256xf32>
    %c1_54 = arith.constant 1 : index
    %c0_55 = arith.constant 0 : index
    %c0_56 = arith.constant 0 : index
    %111 = vector.load %arg7[%c1_54, %c0_55, %c0_56] : memref<3x8x1xf32, #tpu.memory_space<vmem>>, vector<1x8x1xf32>
    %112 = vector.shape_cast %111 : vector<1x8x1xf32> to vector<8x1xf32>
    %113 = vector.broadcast %112 : vector<8x1xf32> to vector<8x256xf32>
    %114 = arith.addf %110, %113 : vector<8x256xf32>
    %cst_57 = arith.constant 0.000000e+00 : f32
    %115 = vector.broadcast %cst_57 : f32 to vector<8x256xf32>
    %116 = arith.maximumf %114, %115 : vector<8x256xf32>
    %117 = arith.addf %116, %52 : vector<8x256xf32>
    %c1_i32_58 = arith.constant 1 : i32
    %118 = tpu.dynamic_rotate %117 by %c1_i32_58 dim 1 : vector<8x256xf32>, i32 -> vector<8x256xf32>
    %119 = arith.mulf %21, %118 : vector<8x256xf32>
    %c255_i32_59 = arith.constant 255 : i32
    %120 = tpu.dynamic_rotate %117 by %c255_i32_59 dim 1 : vector<8x256xf32>, i32 -> vector<8x256xf32>
    %121 = arith.mulf %26, %120 : vector<8x256xf32>
    %c16_i32_60 = arith.constant 16 : i32
    %122 = tpu.dynamic_rotate %119 by %c16_i32_60 dim 1 : vector<8x256xf32>, i32 -> vector<8x256xf32>
    %123 = arith.mulf %31, %122 : vector<8x256xf32>
    %c16_i32_61 = arith.constant 16 : i32
    %124 = tpu.dynamic_rotate %117 by %c16_i32_61 dim 1 : vector<8x256xf32>, i32 -> vector<8x256xf32>
    %125 = arith.mulf %31, %124 : vector<8x256xf32>
    %c16_i32_62 = arith.constant 16 : i32
    %126 = tpu.dynamic_rotate %121 by %c16_i32_62 dim 1 : vector<8x256xf32>, i32 -> vector<8x256xf32>
    %127 = arith.mulf %31, %126 : vector<8x256xf32>
    %c240_i32_63 = arith.constant 240 : i32
    %128 = tpu.dynamic_rotate %119 by %c240_i32_63 dim 1 : vector<8x256xf32>, i32 -> vector<8x256xf32>
    %129 = arith.mulf %36, %128 : vector<8x256xf32>
    %c240_i32_64 = arith.constant 240 : i32
    %130 = tpu.dynamic_rotate %117 by %c240_i32_64 dim 1 : vector<8x256xf32>, i32 -> vector<8x256xf32>
    %131 = arith.mulf %36, %130 : vector<8x256xf32>
    %c240_i32_65 = arith.constant 240 : i32
    %132 = tpu.dynamic_rotate %121 by %c240_i32_65 dim 1 : vector<8x256xf32>, i32 -> vector<8x256xf32>
    %133 = arith.mulf %36, %132 : vector<8x256xf32>
    %134 = tpu.concatenate %123, %125, %127, %119, %117, %121, %129, %131, %133 in 0 : vector<8x256xf32>, vector<8x256xf32>, vector<8x256xf32>, vector<8x256xf32>, vector<8x256xf32>, vector<8x256xf32>, vector<8x256xf32>, vector<8x256xf32>, vector<8x256xf32> -> vector<72x256xf32>
    %135 = arith.truncf %134 : vector<72x256xf32> to vector<72x256xbf16>
    %c2 = arith.constant 2 : index
    %c0_66 = arith.constant 0 : index
    %c0_67 = arith.constant 0 : index
    %136 = vector.load %arg5[%c2, %c0_66, %c0_67] : memref<3x8x72xbf16, #tpu.memory_space<vmem>>, vector<1x8x72xbf16>
    %137 = vector.shape_cast %136 : vector<1x8x72xbf16> to vector<8x72xbf16>
    %cst_68 = arith.constant dense<0.000000e+00> : vector<8x256xf32>
    %138 = tpu.matmul %137, %135, %cst_68 {dimension_numbers = #tpu.dot_dimension_numbers<[1], [0], [0], [1], [0, 0, 1, 1], [], []>} : vector<8x72xbf16>, vector<72x256xbf16>, vector<8x256xf32> -> vector<8x256xf32>
    %c2_69 = arith.constant 2 : index
    %c0_70 = arith.constant 0 : index
    %c0_71 = arith.constant 0 : index
    %139 = vector.load %arg6[%c2_69, %c0_70, %c0_71] : memref<3x8x1xf32, #tpu.memory_space<vmem>>, vector<1x8x1xf32>
    %140 = vector.shape_cast %139 : vector<1x8x1xf32> to vector<8x1xf32>
    %141 = vector.broadcast %140 : vector<8x1xf32> to vector<8x256xf32>
    %142 = arith.mulf %138, %141 : vector<8x256xf32>
    %c2_72 = arith.constant 2 : index
    %c0_73 = arith.constant 0 : index
    %c0_74 = arith.constant 0 : index
    %143 = vector.load %arg7[%c2_72, %c0_73, %c0_74] : memref<3x8x1xf32, #tpu.memory_space<vmem>>, vector<1x8x1xf32>
    %144 = vector.shape_cast %143 : vector<1x8x1xf32> to vector<8x1xf32>
    %145 = vector.broadcast %144 : vector<8x1xf32> to vector<8x256xf32>
    %146 = arith.addf %142, %145 : vector<8x256xf32>
    %cst_75 = arith.constant 0.000000e+00 : f32
    %147 = vector.broadcast %cst_75 : f32 to vector<8x256xf32>
    %148 = arith.maximumf %146, %147 : vector<8x256xf32>
    %149 = tpu.concatenate %84, %116, %148, %53 in 0 : vector<8x256xf32>, vector<8x256xf32>, vector<8x256xf32>, vector<8x256xf32> -> vector<32x256xf32>
    %150 = arith.truncf %149 : vector<32x256xf32> to vector<32x256xbf16>
    %c0_76 = arith.constant 0 : index
    %c0_77 = arith.constant 0 : index
    %151 = vector.load %arg8[%c0_76, %c0_77] : memref<64x32xbf16, #tpu.memory_space<vmem>>, vector<64x32xbf16>
    %cst_78 = arith.constant dense<0.000000e+00> : vector<64x256xf32>
    %152 = tpu.matmul %151, %150, %cst_78 {dimension_numbers = #tpu.dot_dimension_numbers<[1], [0], [0], [1], [0, 0, 1, 1], [], []>} : vector<64x32xbf16>, vector<32x256xbf16>, vector<64x256xf32> -> vector<64x256xf32>
    %c0_79 = arith.constant 0 : index
    %c0_80 = arith.constant 0 : index
    %153 = vector.load %arg9[%c0_79, %c0_80] : memref<64x1xf32, #tpu.memory_space<vmem>>, vector<64x1xf32>
    %154 = vector.broadcast %153 : vector<64x1xf32> to vector<64x256xf32>
    %155 = arith.mulf %152, %154 : vector<64x256xf32>
    %c0_81 = arith.constant 0 : index
    %c0_82 = arith.constant 0 : index
    %156 = vector.load %arg10[%c0_81, %c0_82] : memref<64x1xf32, #tpu.memory_space<vmem>>, vector<64x1xf32>
    %157 = vector.broadcast %156 : vector<64x1xf32> to vector<64x256xf32>
    %158 = arith.addf %155, %157 : vector<64x256xf32>
    %c0_83 = arith.constant 0 : index
    %c0_84 = arith.constant 0 : index
    %c0_85 = arith.constant 0 : index
    %159 = vector.load %arg1[%c0_83, %c0_84, %c0_85] : memref<1x64x256xf32, #tpu.memory_space<vmem>>, vector<1x64x256xf32>
    %160 = vector.shape_cast %159 : vector<1x64x256xf32> to vector<64x256xf32>
    %161 = arith.addf %158, %160 : vector<64x256xf32>
    %cst_86 = arith.constant 0.000000e+00 : f32
    %162 = vector.broadcast %cst_86 : f32 to vector<64x256xf32>
    %163 = arith.maximumf %161, %162 : vector<64x256xf32>
    %c0_87 = arith.constant 0 : index
    %c0_88 = arith.constant 0 : index
    %c0_89 = arith.constant 0 : index
    %164 = vector.load %arg11[%c0_87, %c0_88, %c0_89] : memref<1x64x256xf32, #tpu.memory_space<vmem>>, vector<1x64x256xf32>
    %165 = vector.shape_cast %164 : vector<1x64x256xf32> to vector<64x256xf32>
    %166 = vector.shape_cast %163 : vector<64x256xf32> to vector<1x64x256xf32>
    tpu.vector_store %arg11[%c0_87, %c0_88, %c0_89], %166 {strides = array<i32>} : memref<1x64x256xf32, #tpu.memory_space<vmem>>, vector<1x64x256xf32>,
    return
  }
  func.func @transform_0(%arg0: i32) -> (i32, i32, i32) {
    %c0_i32 = arith.constant 0 : i32
    %c0_i32_0 = arith.constant 0 : i32
    %c0_i32_1 = arith.constant 0 : i32
    return %arg0, %c0_i32, %c0_i32_0 : i32, i32, i32
  }
  func.func @transform_1(%arg0: i32) -> (i32, i32) {
    %c0_i32 = arith.constant 0 : i32
    %c0_i32_0 = arith.constant 0 : i32
    %c0_i32_1 = arith.constant 0 : i32
    return %c0_i32, %c0_i32_0 : i32, i32
  }
  func.func @transform_2(%arg0: i32) -> (i32, i32) {
    %c0_i32 = arith.constant 0 : i32
    %c0_i32_0 = arith.constant 0 : i32
    %c0_i32_1 = arith.constant 0 : i32
    return %c0_i32, %c0_i32_0 : i32, i32
  }
  func.func @transform_3(%arg0: i32) -> (i32, i32) {
    %c0_i32 = arith.constant 0 : i32
    %c0_i32_0 = arith.constant 0 : i32
    %c0_i32_1 = arith.constant 0 : i32
    return %c0_i32, %c0_i32_0 : i32, i32
  }
  func.func @transform_4(%arg0: i32) -> (i32, i32, i32) {
    %c0_i32 = arith.constant 0 : i32
    %c0_i32_0 = arith.constant 0 : i32
    %c0_i32_1 = arith.constant 0 : i32
    %c0_i32_2 = arith.constant 0 : i32
    return %c0_i32, %c0_i32_0, %c0_i32_1 : i32, i32, i32
  }
  func.func @transform_5(%arg0: i32) -> (i32, i32, i32) {
    %c0_i32 = arith.constant 0 : i32
    %c0_i32_0 = arith.constant 0 : i32
    %c0_i32_1 = arith.constant 0 : i32
    %c0_i32_2 = arith.constant 0 : i32
    return %c0_i32, %c0_i32_0, %c0_i32_1 : i32, i32, i32
  }
  func.func @transform_6(%arg0: i32) -> (i32, i32, i32) {
    %c0_i32 = arith.constant 0 : i32
    %c0_i32_0 = arith.constant 0 : i32
    %c0_i32_1 = arith.constant 0 : i32
    %c0_i32_2 = arith.constant 0 : i32
    return %c0_i32, %c0_i32_0, %c0_i32_1 : i32, i32, i32
  }
  func.func @transform_7(%arg0: i32) -> (i32, i32) {
    %c0_i32 = arith.constant 0 : i32
    %c0_i32_0 = arith.constant 0 : i32
    %c0_i32_1 = arith.constant 0 : i32
    return %c0_i32, %c0_i32_0 : i32, i32
  }
  func.func @transform_8(%arg0: i32) -> (i32, i32) {
    %c0_i32 = arith.constant 0 : i32
    %c0_i32_0 = arith.constant 0 : i32
    %c0_i32_1 = arith.constant 0 : i32
    return %c0_i32, %c0_i32_0 : i32, i32
  }
  func.func @transform_9(%arg0: i32) -> (i32, i32) {
    %c0_i32 = arith.constant 0 : i32
    %c0_i32_0 = arith.constant 0 : i32
    %c0_i32_1 = arith.constant 0 : i32
    return %c0_i32, %c0_i32_0 : i32, i32
  }
  func.func @transform_10(%arg0: i32) -> (i32, i32, i32) {
    %c0_i32 = arith.constant 0 : i32
    %c0_i32_0 = arith.constant 0 : i32
    %c0_i32_1 = arith.constant 0 : i32
    return %arg0, %c0_i32, %c0_i32_0 : i32, i32, i32
  }
}

</mosaic_0001>

<llo_original>
// kernel: tpu_custom_call.1
$region0: #{tpu_custom_call.1}
  #allocation0 [shape = 'u32[]', space=smem, size = 0x4, offset = 0x4, fixed_abs, tag = 'smem constant byte address 0x4 - core index']
  #allocation1 [shape = 'u32[144,128]{1,0:T(1,128)}', space=vmem, size = 0x12000, scoped, tag = 'internal scratch']
  %s0 = inlined_call_operand.vmem [shape: f32[2,64,256], index: 0, kind: input, shape index: {}]
  %s1 = inlined_call_operand.vmem [shape: bf16[32,64], index: 1, kind: input, shape index: {}]
  %s2 = inlined_call_operand.vmem [shape: f32[32,1], index: 2, kind: input, shape index: {}]
  %s3 = inlined_call_operand.vmem [shape: f32[32,1], index: 3, kind: input, shape index: {}]
  %s4 = inlined_call_operand.vmem [shape: bf16[3,8,72], index: 4, kind: input, shape index: {}]
  %s5 = inlined_call_operand.vmem [shape: f32[3,8,1], index: 5, kind: input, shape index: {}]
  %s6 = inlined_call_operand.vmem [shape: f32[3,8,1], index: 6, kind: input, shape index: {}]
  %s7 = inlined_call_operand.vmem [shape: bf16[64,32], index: 7, kind: input, shape index: {}]
  %s8 = inlined_call_operand.vmem [shape: f32[64,1], index: 8, kind: input, shape index: {}]
  %s9 = inlined_call_operand.vmem [shape: f32[64,1], index: 9, kind: input, shape index: {}]
  %s10 = inlined_call_operand.hbm [shape: f32[2,64,256], index: 10, kind: output, shape index: {}]
  %s11 = sld [smem:[#allocation0]]
  $region73: #{tpu_custom_call.1} parent=0
    _
  %s13 = ssub.s32 1, %s11
  %s14 = scalar_select 0, %s13, %s11
  $region1: #{tpu_custom_call.1} parent=0
    #allocation2 [shape = 'u8[131072]{0}', space=vmem, size = 0x20000, scoped, tag = 'output window, operand 0']
    #allocation3 [shape = 's32[2]{0}', space=sflag, size = 0x8, scoped, tag = 'scoped memory for tpu_custom_call.1']
    %15 = vsyncpa [#allocation3], 0
    %s16 = scalar_lea.sflag [#allocation3], 1
    %17 = vsyncpa %s16, 0
    loop: start=0, step=1, limit=4
    $region2: #{tpu_custom_call.1} parent=1 // loop_pre_header
      _
    $region3: #{tpu_custom_call.1} parent=1 // loop_header
      %s19 = sphi 0, %s23
      %p20 = scmp.ge.s32.totalorder %s19, 4
      %s29 = sphi 0, %s31
      %s32 = sphi 0, %s29
      %s33 = sphi 0, %s32
      %s49 = sphi 0, %s33
      %s53 = sphi 0, %s53
      %s55 = sphi 0, %s53
      %s56 = sphi 0, %s55
      %s70 = sphi 0, %s56
      %s74 = sphi 0, %s74
      %s76 = sphi 0, %s74
      %s77 = sphi 0, %s76
      %s91 = sphi 0, %s77
      %s95 = sphi 0, %s95
      %s97 = sphi 0, %s95
      %s98 = sphi 0, %s97
      %s112 = sphi 0, %s98
      %s116 = sphi 0, %s116
      %s118 = sphi 0, %s116
      %s119 = sphi 0, %s118
      %s133 = sphi 0, %s119
      %s137 = sphi 0, %s137
      %s139 = sphi 0, %s137
      %s140 = sphi 0, %s139
      %s154 = sphi 0, %s140
      %s158 = sphi 0, %s158
      %s160 = sphi 0, %s158
      %s161 = sphi 0, %s160
      %s175 = sphi 0, %s161
      %s179 = sphi 0, %s179
      %s181 = sphi 0, %s179
      %s182 = sphi 0, %s181
      %s196 = sphi 0, %s182
      %s200 = sphi 0, %s200
      %s202 = sphi 0, %s200
      %s203 = sphi 0, %s202
      %s217 = sphi 0, %s203
      %s221 = sphi 0, %s221
      %s223 = sphi 0, %s221
      %s224 = sphi 0, %s223
      %s238 = sphi 0, %s224
      %s244 = sphi 0, %s246
      %s247 = sphi 0, %s244
      %s248 = sphi 0, %s247
      %s264 = sphi 0, %s248
    $region4: #{tpu_custom_call.1} parent=1 // loop_header_branch
      %22 = sbr.rel (%p20) target = $region8
    $region5: #{tpu_custom_call.1} parent=1 // loop_body
      %s24 = ssub.s32 %s19, 1
      %s25 = ssub.s32 %s19, 2
      %s26 = sadd.s32 %s19, 1
      %s27 = ssub.s32 %s19, %s26
      %p28 = scmp.eq.s32.totalorder %s27, 0
      %s30 = sadd.s32 %s29, 1
      %s31 = scalar_select %p28, %s29, %s30
      %p34 = pneg %p28
      %p35 = scmp.eq.s32.totalorder %s19, 1
      %p36 = por %p34, %p35
      %p37 = scmp.ne.s32.totalorder %s29, %s32
      %p38 = scmp.eq.s32.totalorder %s19, 0
      %p39 = por %p37, %p38
      %p40 = scmp.ne.s32.totalorder %s29, %s32
      %p41 = scmp.eq.s32.totalorder %s24, 1
      %p42 = por %p40, %p41
      %p43 = scmp.ne.s32.totalorder %s32, %s33
      %p44 = scmp.eq.s32.totalorder %s24, 0
      %p45 = por %p43, %p44
      %p46 = scmp.ne.s32.totalorder %s32, %s33
      %p47 = scmp.eq.s32.totalorder %s25, 1
      %p48 = por %p46, %p47
      %p50 = scmp.ne.s32.totalorder %s33, %s49
      %p51 = scmp.eq.s32.totalorder %s25, 0
      %p52 = por %p50, %p51
      %s54 = sadd.s32 %s53, 1
      %p57 = scmp.eq.s32.totalorder %s19, 1
      %p58 = scmp.ne.s32.totalorder %s53, %s55
      %p59 = scmp.eq.s32.totalorder %s19, 0
      %p60 = por %p58, %p59
      %p61 = scmp.ne.s32.totalorder %s53, %s55
      %p62 = scmp.eq.s32.totalorder %s24, 1
      %p63 = por %p61, %p62
      %p64 = scmp.ne.s32.totalorder %s55, %s56
      %p65 = scmp.eq.s32.totalorder %s24, 0
      %p66 = por %p64, %p65
      %p67 = scmp.ne.s32.totalorder %s55, %s56
      %p68 = scmp.eq.s32.totalorder %s25, 1
      %p69 = por %p67, %p68
      %p71 = scmp.ne.s32.totalorder %s56, %s70
      %p72 = scmp.eq.s32.totalorder %s25, 0
      %p73 = por %p71, %p72
      %s75 = sadd.s32 %s74, 1
      %p78 = scmp.eq.s32.totalorder %s19, 1
      %p79 = scmp.ne.s32.totalorder %s74, %s76
      %p80 = scmp.eq.s32.totalorder %s19, 0
      %p81 = por %p79, %p80
      %p82 = scmp.ne.s32.totalorder %s74, %s76
      %p83 = scmp.eq.s32.totalorder %s24, 1
      %p84 = por %p82, %p83
      %p85 = scmp.ne.s32.totalorder %s76, %s77
      %p86 = scmp.eq.s32.totalorder %s24, 0
      %p87 = por %p85, %p86
      %p88 = scmp.ne.s32.totalorder %s76, %s77
      %p89 = scmp.eq.s32.totalorder %s25, 1
      %p90 = por %p88, %p89
      %p92 = scmp.ne.s32.totalorder %s77, %s91
      %p93 = scmp.eq.s32.totalorder %s25, 0
      %p94 = por %p92, %p93
      %s96 = sadd.s32 %s95, 1
      %p99 = scmp.eq.s32.totalorder %s19, 1
      %p100 = scmp.ne.s32.totalorder %s95, %s97
      %p101 = scmp.eq.s32.totalorder %s19, 0
      %p102 = por %p100, %p101
      %p103 = scmp.ne.s32.totalorder %s95, %s97
      %p104 = scmp.eq.s32.totalorder %s24, 1
      %p105 = por %p103, %p104
      %p106 = scmp.ne.s32.totalorder %s97, %s98
      %p107 = scmp.eq.s32.totalorder %s24, 0
      %p108 = por %p106, %p107
      %p109 = scmp.ne.s32.totalorder %s97, %s98
      %p110 = scmp.eq.s32.totalorder %s25, 1
      %p111 = por %p109, %p110
      %p113 = scmp.ne.s32.totalorder %s98, %s112
      %p114 = scmp.eq.s32.totalorder %s25, 0
      %p115 = por %p113, %p114
      %s117 = sadd.s32 %s116, 1
      %p120 = scmp.eq.s32.totalorder %s19, 1
      %p121 = scmp.ne.s32.totalorder %s116, %s118
      %p122 = scmp.eq.s32.totalorder %s19, 0
      %p123 = por %p121, %p122
      %p124 = scmp.ne.s32.totalorder %s116, %s118
      %p125 = scmp.eq.s32.totalorder %s24, 1
      %p126 = por %p124, %p125
      %p127 = scmp.ne.s32.totalorder %s118, %s119
      %p128 = scmp.eq.s32.totalorder %s24, 0
      %p129 = por %p127, %p128
      %p130 = scmp.ne.s32.totalorder %s118, %s119
      %p131 = scmp.eq.s32.totalorder %s25, 1
      %p132 = por %p130, %p131
      %p134 = scmp.ne.s32.totalorder %s119, %s133
      %p135 = scmp.eq.s32.totalorder %s25, 0
      %p136 = por %p134, %p135
      %s138 = sadd.s32 %s137, 1
      %p141 = scmp.eq.s32.totalorder %s19, 1
      %p142 = scmp.ne.s32.totalorder %s137, %s139
      %p143 = scmp.eq.s32.totalorder %s19, 0
      %p144 = por %p142, %p143
      %p145 = scmp.ne.s32.totalorder %s137, %s139
      %p146 = scmp.eq.s32.totalorder %s24, 1
      %p147 = por %p145, %p146
      %p148 = scmp.ne.s32.totalorder %s139, %s140
      %p149 = scmp.eq.s32.totalorder %s24, 0
      %p150 = por %p148, %p149
      %p151 = scmp.ne.s32.totalorder %s139, %s140
      %p152 = scmp.eq.s32.totalorder %s25, 1
      %p153 = por %p151, %p152
      %p155 = scmp.ne.s32.totalorder %s140, %s154
      %p156 = scmp.eq.s32.totalorder %s25, 0
      %p157 = por %p155, %p156
      %s159 = sadd.s32 %s158, 1
      %p162 = scmp.eq.s32.totalorder %s19, 1
      %p163 = scmp.ne.s32.totalorder %s158, %s160
      %p164 = scmp.eq.s32.totalorder %s19, 0
      %p165 = por %p163, %p164
      %p166 = scmp.ne.s32.totalorder %s158, %s160
      %p167 = scmp.eq.s32.totalorder %s24, 1
      %p168 = por %p166, %p167
      %p169 = scmp.ne.s32.totalorder %s160, %s161
      %p170 = scmp.eq.s32.totalorder %s24, 0
      %p171 = por %p169, %p170
      %p172 = scmp.ne.s32.totalorder %s160, %s161
      %p173 = scmp.eq.s32.totalorder %s25, 1
      %p174 = por %p172, %p173
      %p176 = scmp.ne.s32.totalorder %s161, %s175
      %p177 = scmp.eq.s32.totalorder %s25, 0
      %p178 = por %p176, %p177
      %s180 = sadd.s32 %s179, 1
      %p183 = scmp.eq.s32.totalorder %s19, 1
      %p184 = scmp.ne.s32.totalorder %s179, %s181
      %p185 = scmp.eq.s32.totalorder %s19, 0
      %p186 = por %p184, %p185
      %p187 = scmp.ne.s32.totalorder %s179, %s181
      %p188 = scmp.eq.s32.totalorder %s24, 1
      %p189 = por %p187, %p188
      %p190 = scmp.ne.s32.totalorder %s181, %s182
      %p191 = scmp.eq.s32.totalorder %s24, 0
      %p192 = por %p190, %p191
      %p193 = scmp.ne.s32.totalorder %s181, %s182
      %p194 = scmp.eq.s32.totalorder %s25, 1
      %p195 = por %p193, %p194
      %p197 = scmp.ne.s32.totalorder %s182, %s196
      %p198 = scmp.eq.s32.totalorder %s25, 0
      %p199 = por %p197, %p198
      %s201 = sadd.s32 %s200, 1
      %p204 = scmp.eq.s32.totalorder %s19, 1
      %p205 = scmp.ne.s32.totalorder %s200, %s202
      %p206 = scmp.eq.s32.totalorder %s19, 0
      %p207 = por %p205, %p206
      %p208 = scmp.ne.s32.totalorder %s200, %s202
      %p209 = scmp.eq.s32.totalorder %s24, 1
      %p210 = por %p208, %p209
      %p211 = scmp.ne.s32.totalorder %s202, %s203
      %p212 = scmp.eq.s32.totalorder %s24, 0
      %p213 = por %p211, %p212
      %p214 = scmp.ne.s32.totalorder %s202, %s203
      %p215 = scmp.eq.s32.totalorder %s25, 1
      %p216 = por %p214, %p215
      %p218 = scmp.ne.s32.totalorder %s203, %s217
      %p219 = scmp.eq.s32.totalorder %s25, 0
      %p220 = por %p218, %p219
      %s222 = sadd.s32 %s221, 1
      %p225 = scmp.eq.s32.totalorder %s19, 1
      %p226 = scmp.ne.s32.totalorder %s221, %s223
      %p227 = scmp.eq.s32.totalorder %s19, 0
      %p228 = por %p226, %p227
      %p229 = scmp.ne.s32.totalorder %s221, %s223
      %p230 = scmp.eq.s32.totalorder %s24, 1
      %p231 = por %p229, %p230
      %p232 = scmp.ne.s32.totalorder %s223, %s224
      %p233 = scmp.eq.s32.totalorder %s24, 0
      %p234 = por %p232, %p233
      %p235 = scmp.ne.s32.totalorder %s223, %s224
      %p236 = scmp.eq.s32.totalorder %s25, 1
      %p237 = por %p235, %p236
      %p239 = scmp.ne.s32.totalorder %s224, %s238
      %p240 = scmp.eq.s32.totalorder %s25, 0
      %p241 = por %p239, %p240
      %s242 = ssub.s32 %s19, %s26
      %p243 = scmp.eq.s32.totalorder %s242, 0
      %s245 = sadd.s32 %s244, 1
      %s246 = scalar_select %p243, %s244, %s245
      %p249 = pneg %p243
      %p250 = scmp.eq.s32.totalorder %s19, 1
      %p251 = por %p249, %p250
      %p252 = scmp.ne.s32.totalorder %s244, %s247
      %p253 = scmp.eq.s32.totalorder %s19, 0
      %p254 = por %p252, %p253
      %p255 = scmp.ne.s32.totalorder %s244, %s247
      %p256 = scmp.eq.s32.totalorder %s24, 1
      %p257 = por %p255, %p256
      %p258 = scmp.ne.s32.totalorder %s247, %s248
      %p259 = scmp.eq.s32.totalorder %s24, 0
      %p260 = por %p258, %p259
      %p261 = scmp.ne.s32.totalorder %s247, %s248
      %p262 = scmp.eq.s32.totalorder %s25, 1
      %p263 = por %p261, %p262
      %p265 = scmp.ne.s32.totalorder %s248, %s264
      %p266 = scmp.eq.s32.totalorder %s25, 0
      %p267 = por %p265, %p266
      %p268 = scmp.le.s32.totalorder 1, %s19
      %p269 = scmp.lt.s32.totalorder %s19, 3
      %p270 = pnand %p268, %p269
      %p271 = pneg %p270
      // Predicated region
      $region9: #{tpu_custom_call.1} parent=5 // pred_check
        _
      $region10: #{tpu_custom_call.1} parent=5 // pred_check_branch
        %273 = sbr.rel (%p270) target = $region12
      $region11: #{tpu_custom_call.1} parent=5 // pred_region
        %s274 = ssub.s32 %s19, 1
        // Predicated region
        $region13: #{tpu_custom_call.1} parent=11 // pred_check
          %p275 = pneg %p66
        $region14: #{tpu_custom_call.1} parent=11 // pred_check_branch
          %277 = sbr.rel (%p275) target = $region16
        $region15: #{tpu_custom_call.1} parent=11 // pred_region
          _
        $region16: #{tpu_custom_call.1} parent=11 // pred_fallthru
          _
        // Predicated region
        $region17: #{tpu_custom_call.1} parent=11 // pred_check
          %p278 = pneg %p87
        $region18: #{tpu_custom_call.1} parent=11 // pred_check_branch
          %280 = sbr.rel (%p278) target = $region20
        $region19: #{tpu_custom_call.1} parent=11 // pred_region
          _
        $region20: #{tpu_custom_call.1} parent=11 // pred_fallthru
          _
        // Predicated region
        $region21: #{tpu_custom_call.1} parent=11 // pred_check
          %p281 = pneg %p108
        $region22: #{tpu_custom_call.1} parent=11 // pred_check_branch
          %283 = sbr.rel (%p281) target = $region24
        $region23: #{tpu_custom_call.1} parent=11 // pred_region
          _
        $region24: #{tpu_custom_call.1} parent=11 // pred_fallthru
          _
        // Predicated region
        $region25: #{tpu_custom_call.1} parent=11 // pred_check
          %p284 = pneg %p129
        $region26: #{tpu_custom_call.1} parent=11 // pred_check_branch
          %286 = sbr.rel (%p284) target = $region28
        $region27: #{tpu_custom_call.1} parent=11 // pred_region
          _
        $region28: #{tpu_custom_call.1} parent=11 // pred_fallthru
          _
        // Predicated region
        $region29: #{tpu_custom_call.1} parent=11 // pred_check
          %p287 = pneg %p150
        $region30: #{tpu_custom_call.1} parent=11 // pred_check_branch
          %289 = sbr.rel (%p287) target = $region32
        $region31: #{tpu_custom_call.1} parent=11 // pred_region
          _
        $region32: #{tpu_custom_call.1} parent=11 // pred_fallthru
          _
        // Predicated region
        $region33: #{tpu_custom_call.1} parent=11 // pred_check
          %p290 = pneg %p171
        $region34: #{tpu_custom_call.1} parent=11 // pred_check_branch
          %292 = sbr.rel (%p290) target = $region36
        $region35: #{tpu_custom_call.1} parent=11 // pred_region
          _
        $region36: #{tpu_custom_call.1} parent=11 // pred_fallthru
          _
        // Predicated region
        $region37: #{tpu_custom_call.1} parent=11 // pred_check
          %p293 = pneg %p192
        $region38: #{tpu_custom_call.1} parent=11 // pred_check_branch
          %295 = sbr.rel (%p293) target = $region40
        $region39: #{tpu_custom_call.1} parent=11 // pred_region
          _
        $region40: #{tpu_custom_call.1} parent=11 // pred_fallthru
          _
        // Predicated region
        $region41: #{tpu_custom_call.1} parent=11 // pred_check
          %p296 = pneg %p213
        $region42: #{tpu_custom_call.1} parent=11 // pred_check_branch
          %298 = sbr.rel (%p296) target = $region44
        $region43: #{tpu_custom_call.1} parent=11 // pred_region
          _
        $region44: #{tpu_custom_call.1} parent=11 // pred_fallthru
          _
        // Predicated region
        $region45: #{tpu_custom_call.1} parent=11 // pred_check
          %p299 = pneg %p234
        $region46: #{tpu_custom_call.1} parent=11 // pred_check_branch
          %301 = sbr.rel (%p299) target = $region48
        $region47: #{tpu_custom_call.1} parent=11 // pred_region
          _
        $region48: #{tpu_custom_call.1} parent=11 // pred_fallthru
          _
      $region12: #{tpu_custom_call.1} parent=5 // pred_fallthru
        _
      %p302 = scmp.lt.s32.totalorder %s19, 2
      // Predicated region
      $region49: #{tpu_custom_call.1} parent=5 // pred_check
        %p303 = pneg %p302
      $region50: #{tpu_custom_call.1} parent=5 // pred_check_branch
        %305 = sbr.rel (%p303) target = $region52
      $region51: #{tpu_custom_call.1} parent=5 // pred_region
        // Predicated region
        $region53: #{tpu_custom_call.1} parent=51 // pred_check
          %p306 = pneg %p39
        $region54: #{tpu_custom_call.1} parent=51 // pred_check_branch
          %308 = sbr.rel (%p306) target = $region56
        $region55: #{tpu_custom_call.1} parent=51 // pred_region
          %p309 = scmp.lt.s32.totalorder %s19, 1
          %s310 = scalar_select %p309, %s19, 1
          %s311 = smul.addr %s310, 16
          %s312 = smul.addr %s311, 8
          %s313 = scalar_lea.vmem %s0, %s312
        $region56: #{tpu_custom_call.1} parent=51 // pred_fallthru
          _
      $region52: #{tpu_custom_call.1} parent=5 // pred_fallthru
        _
      %p314 = scmp.le.s32.totalorder 1, %s19
      %p315 = scmp.lt.s32.totalorder %s19, 3
      %p316 = pnand %p314, %p315
      %p317 = pneg %p316
      // Predicated region
      $region57: #{tpu_custom_call.1} parent=5 // pred_check
        _
      $region58: #{tpu_custom_call.1} parent=5 // pred_check_branch
        %319 = sbr.rel (%p316) target = $region60
      $region59: #{tpu_custom_call.1} parent=5 // pred_region
        %s320 = ssub.s32 %s19, 1
        %p321 = scmp.lt.s32.totalorder %s24, 1
        %s322 = scalar_select %p321, %s24, 1
        %s323 = smul.addr %s322, 16
        %s324 = smul.addr %s323, 8
        %s325 = scalar_lea.vmem %s0, %s324
        %p326 = pneg %p45
        %p327 = pneg %p42
        %p328 = pneg %p66
        %p329 = pneg %p63
        %p330 = pneg %p87
        %p331 = pneg %p84
        %p332 = pneg %p108
        %p333 = pneg %p105
        %p334 = pneg %p129
        %p335 = pneg %p126
        %p336 = pneg %p150
        %p337 = pneg %p147
        %p338 = pneg %p171
        %p339 = pneg %p168
        %p340 = pneg %p192
        %p341 = pneg %p189
        %p342 = pneg %p213
        %p343 = pneg %p210
        %p344 = pneg %p234
        %p345 = pneg %p231
        %p346 = pneg %p260
        %p347 = pneg %p257
        %s348 = sand.u32 %s247, 1
        %s349 = scalar_lea.sflag [#allocation3], %s348
        %s350 = sand.u32 %s247, 1
        %s351 = smul.addr %s350, 128
        %s352 = scalar_lea.vmem [#allocation2], %s351
        %p353 = scmp.lt.s32.totalorder %s24, 1
        %s354 = scalar_select %p353, %s24, 1
        %s355 = smul.addr %s354, 16
        %s356 = smul.addr %s355, 8
        %s357 = scalar_lea.vmem %s0, %s356
        %v359 = vlaneseq
        %v360 = vand.u32 %v359, 127
        %v361 = vadd.s32 %v360, 128
        %vm362 = vcmp.lt.s32.totalorder %v360, 0
        %v363 = vsub.s32 0, %v360
        %v364 = vsel %vm362, %v363, %v360
        %v365 = vshrl.u32 %v364, 4
        %v366 = vand.u32 %v364, 15
        %v367 = vsub.s32 0, %v366
        %v368 = vsel %vm362, %v367, %v366
        %vm369 = vcmp.lt.s32.totalorder %v361, 0
        %v370 = vsub.s32 0, %v361
        %v371 = vsel %vm369, %v370, %v361
        %v372 = vshrl.u32 %v371, 4
        %v373 = vand.u32 %v371, 15
        %v374 = vsub.s32 0, %v373
        %v375 = vsel %vm369, %v374, %v373
        %vm376 = vcmp.ne.s32.totalorder %v368, 0
        %vm377 = vcmp.ne.s32.totalorder %v375, 0
        %vm378 = vcmp.lt.s32.totalorder %v368, 0
        %vm379 = vcmp.lt.s32.totalorder %v375, 0
        %vm380 = vmand %vm378, %vm376
        %vm381 = vmand %vm379, %vm377
        %v382 = vadd.s32 %v368, 16
        %v383 = vadd.s32 %v375, 16
        %v384 = vsel %vm380, %v382, %v368
        %v385 = vsel %vm381, %v383, %v375
        %vm386 = vcmp.ge.s32.totalorder %v384, 1
        %vm387 = vcmp.ge.s32.totalorder %v385, 1
        %v388 = vsel %vm386, 1.0, 0.0
        %v389 = vsel %vm387, 1.0, 0.0
        %vm390 = vcmp.le.s32.totalorder %v384, 14
        %vm391 = vcmp.le.s32.totalorder %v385, 14
        %v392 = vsel %vm390, 1.0, 0.0
        %v393 = vsel %vm391, 1.0, 0.0
        %vm394 = vcmp.ge.s32.totalorder %v360, 16
        %vm395 = vcmp.ge.s32.totalorder %v361, 16
        %v396 = vsel %vm394, 1.0, 0.0
        %v397 = vsel %vm395, 1.0, 0.0
        %vm398 = vcmp.lt.s32.totalorder %v360, 240
        %vm399 = vcmp.lt.s32.totalorder %v361, 240
        %v400 = vsel %vm398, 1.0, 0.0
        %v401 = vsel %vm399, 1.0, 0.0
        %v402 = vld [vmem:[%s357] sm:$0xff]
        %v403 = vld [vmem:[%s357 + $0x8] sm:$0xff]
        %v404 = vld [vmem:[%s357 + $0x10] sm:$0xff]
        %v405 = vld [vmem:[%s357 + $0x18] sm:$0xff]
        %v406 = vld [vmem:[%s357 + $0x20] sm:$0xff]
        %v407 = vld [vmem:[%s357 + $0x28] sm:$0xff]
        %v408 = vld [vmem:[%s357 + $0x30] sm:$0xff]
        %v409 = vld [vmem:[%s357 + $0x38] sm:$0xff]
        %v410 = vld [vmem:[%s357 + $0x40] sm:$0xff]
        %v411 = vld [vmem:[%s357 + $0x48] sm:$0xff]
        %v412 = vld [vmem:[%s357 + $0x50] sm:$0xff]
        %v413 = vld [vmem:[%s357 + $0x58] sm:$0xff]
        %v414 = vld [vmem:[%s357 + $0x60] sm:$0xff]
        %v415 = vld [vmem:[%s357 + $0x68] sm:$0xff]
        %v416 = vld [vmem:[%s357 + $0x70] sm:$0xff]
        %v417 = vld [vmem:[%s357 + $0x78] sm:$0xff]
        %v418 = vpack.c.bf16 %v404, %v402
        %v419 = vpack.c.bf16 %v405, %v403
        %v420 = vpack.c.bf16 %v408, %v406
        %v421 = vpack.c.bf16 %v409, %v407
        %v422 = vpack.c.bf16 %v412, %v410
        %v423 = vpack.c.bf16 %v413, %v411
        %v424 = vpack.c.bf16 %v416, %v414
        %v425 = vpack.c.bf16 %v417, %v415
        %v426 = vld [vmem:[%s1] sm:$0xf]
        %v427 = vld [vmem:[%s1 + $0x4] sm:$0xf]
        %v428 = vld [vmem:[%s1 + $0x8] sm:$0xf]
        %v429 = vld [vmem:[%s1 + $0xc] sm:$0xf]
        %v434 = vunpack.c.l.b16 %v426
        %v435 = vunpack.c.l.b16 %v427
        %v436 = vunpack.c.l.b16 %v428
        %v437 = vunpack.c.l.b16 %v429
        %v438 = vpack.c.b16 %v435, %v434
        %v439 = vpack.c.b16 %v437, %v436
        %vm440 = vcmask 523264
        %v442 = vsel %vm440, %v438, 0
        %v445 = vsel %vm440, %v439, 0
        %447 = vmatprep.subr.bf16.mxu0 %v419
        %448 = vmatpush1.bf16.msra.mxu0 %v418
        %449 = vmatprep.subr.bf16.mxu0 %v421
        %450 = vmatpush1.bf16.msra.mxu0 %v420
        %451 = vmatprep.subr.bf16.mxu0 %v423
        %452 = vmatpush1.bf16.msra.mxu0 %v422
        %453 = vmatprep.subr.bf16.mxu0 %v425
        %454 = vmatpush1.bf16.msra.mxu0 %v424
        %455 = vmatprep.subr.bf16.mxu0 0
        %456 = vmatpush1.bf16.msra.mxu0 0
        %457 = vmatprep.subr.bf16.mxu0 0
        %458 = vmatpush1.bf16.msra.mxu0 0
        %459 = vmatprep.subr.bf16.mxu0 0
        %460 = vmatpush1.bf16.msra.mxu0 0
        %461 = vmatprep.subr.bf16.mxu0 0
        %462 = vmatpush1.bf16.msra.mxu0 0
        %463 = vmatprep.subr.bf16.mxu0 0
        %464 = vmatpush1.bf16.msra.mxu0 0
        %465 = vmatprep.subr.bf16.mxu0 0
        %466 = vmatpush1.bf16.msra.mxu0 0
        %467 = vmatprep.subr.bf16.mxu0 0
        %468 = vmatpush1.bf16.msra.mxu0 0
        %469 = vmatprep.subr.bf16.mxu0 0
        %470 = vmatpush1.bf16.msra.mxu0 0
        %471 = vmatprep.subr.bf16.mxu0 0
        %472 = vmatpush1.bf16.msra.mxu0 0
        %473 = vmatprep.subr.bf16.mxu0 0
        %474 = vmatpush1.bf16.msra.mxu0 0
        %475 = vmatprep.subr.bf16.mxu0 0
        %476 = vmatpush1.bf16.msra.mxu0 0
        %477 = vmatprep.subr.bf16.mxu0 0
        %478 = vmatpush1.bf16.msra.mxu0 0
        %479 = vmatprep.mubr.bf16.mxu0 0
        %480 = vmatmul.mubr.bf16.gmra.mrb[0].mxu0 %v442
        %v481 = vpop.f32.mrb[0].mxu0
        %v482 = vadd.f32 0.0, %v481
        %v483 = vpop.f32.mrb[0].mxu0
        %v484 = vadd.f32 0.0, %v483
        %v485 = vpop.f32.mrb[0].mxu0
        %v486 = vadd.f32 0.0, %v485
        %v487 = vpop.f32.mrb[0].mxu0
        %v488 = vadd.f32 0.0, %v487
        %489 = vmatprep.mubr.bf16.mxu0 0
        %490 = vmatmul.mubr.bf16.gmra.mrb[0].mxu0 %v445
        %v491 = vpop.f32.mrb[0].mxu0
        %v492 = vadd.f32 0.0, %v491
        %v493 = vpop.f32.mrb[0].mxu0
        %v494 = vadd.f32 0.0, %v493
        %v495 = vpop.f32.mrb[0].mxu0
        %v496 = vadd.f32 0.0, %v495
        %v497 = vpop.f32.mrb[0].mxu0
        %v498 = vadd.f32 0.0, %v497
        %499 = vdwg.mxu0
        %v500 = vld [vmem:[%s2] sm:$0xff]
        %v501 = vld [vmem:[%s2 + $0x8] sm:$0xff]
        %v502 = vld [vmem:[%s2 + $0x10] sm:$0xff]
        %v503 = vld [vmem:[%s2 + $0x18] sm:$0xff]
        %505 = vset.pattern.permute.xlu0 0
        %506 = vperm.xlu0 %505, %v500
        %v507 = vpop.permute.xlu0 %506
        %510 = vset.pattern.permute.xlu0 0
        %511 = vperm.xlu0 %510, %v501
        %v512 = vpop.permute.xlu0 %511
        %515 = vset.pattern.permute.xlu0 0
        %516 = vperm.xlu0 %515, %v502
        %v517 = vpop.permute.xlu0 %516
        %520 = vset.pattern.permute.xlu0 0
        %521 = vperm.xlu0 %520, %v503
        %v522 = vpop.permute.xlu0 %521
        %v524 = vmul.f32 %v482, %v507
        %v525 = vmul.f32 %v484, %v507
        %v526 = vmul.f32 %v486, %v512
        %v527 = vmul.f32 %v488, %v512
        %v528 = vmul.f32 %v492, %v517
        %v529 = vmul.f32 %v494, %v517
        %v530 = vmul.f32 %v496, %v522
        %v531 = vmul.f32 %v498, %v522
        %v532 = vld [vmem:[%s3] sm:$0xff]
        %v533 = vld [vmem:[%s3 + $0x8] sm:$0xff]
        %v534 = vld [vmem:[%s3 + $0x10] sm:$0xff]
        %v535 = vld [vmem:[%s3 + $0x18] sm:$0xff]
        %537 = vset.pattern.permute.xlu0 0
        %538 = vperm.xlu0 %537, %v532
        %v539 = vpop.permute.xlu0 %538
        %542 = vset.pattern.permute.xlu0 0
        %543 = vperm.xlu0 %542, %v533
        %v544 = vpop.permute.xlu0 %543
        %547 = vset.pattern.permute.xlu0 0
        %548 = vperm.xlu0 %547, %v534
        %v549 = vpop.permute.xlu0 %548
        %552 = vset.pattern.permute.xlu0 0
        %553 = vperm.xlu0 %552, %v535
        %v554 = vpop.permute.xlu0 %553
        %v556 = vadd.f32 %v524, %v539
        %v557 = vadd.f32 %v525, %v539
        %v558 = vadd.f32 %v526, %v544
        %v559 = vadd.f32 %v527, %v544
        %v560 = vadd.f32 %v528, %v549
        %v561 = vadd.f32 %v529, %v549
        %v562 = vadd.f32 %v530, %v554
        %v563 = vadd.f32 %v531, %v554
        %v564 = vmax.f32 %v556, 0.0
        %v565 = vmax.f32 %v557, 0.0
        %v566 = vmax.f32 %v558, 0.0
        %v567 = vmax.f32 %v559, 0.0
        %v568 = vmax.f32 %v560, 0.0
        %v569 = vmax.f32 %v561, 0.0
        %v570 = vmax.f32 %v562, 0.0
        %v571 = vmax.f32 %v563, 0.0
        %572 = vrot.lane.b32.xlu0 %v564, 1
        %v573 = vpop.permute.xlu0 %572
        %574 = vrot.lane.b32.xlu0 %v565, 1
        %v575 = vpop.permute.xlu0 %574
        %vm576 = vcmp.lt.s32.totalorder %v360, 1
        %v577 = vsel %vm576, %v573, %v575
        %v578 = vsel %vm576, %v575, %v573
        %v579 = vmul.f32 %v388, %v578
        %v580 = vmul.f32 %v389, %v577
        %581 = vrot.lane.b32.xlu0 %v564, 127
        %v582 = vpop.permute.xlu0 %581
        %583 = vrot.lane.b32.xlu0 %v565, 127
        %v584 = vpop.permute.xlu0 %583
        %vm585 = vcmp.lt.s32.totalorder %v360, 127
        %v586 = vsel %vm585, %v582, %v584
        %v587 = vsel %vm585, %v584, %v582
        %v588 = vmul.f32 %v392, %v586
        %v589 = vmul.f32 %v393, %v587
        %590 = vrot.lane.b32.xlu0 %v579, 16
        %v591 = vpop.permute.xlu0 %590
        %592 = vrot.lane.b32.xlu0 %v580, 16
        %v593 = vpop.permute.xlu0 %592
        %vm594 = vcmp.lt.s32.totalorder %v360, 16
        %v595 = vsel %vm594, %v591, %v593
        %v596 = vsel %vm594, %v593, %v591
        %v597 = vmul.f32 %v396, %v596
        %v598 = vmul.f32 %v397, %v595
        %599 = vrot.lane.b32.xlu0 %v564, 16
        %v600 = vpop.permute.xlu0 %599
        %601 = vrot.lane.b32.xlu0 %v565, 16
        %v602 = vpop.permute.xlu0 %601
        %v603 = vsel %vm594, %v600, %v602
        %v604 = vsel %vm594, %v602, %v600
        %v605 = vmul.f32 %v396, %v604
        %v606 = vmul.f32 %v397, %v603
        %607 = vrot.lane.b32.xlu0 %v588, 16
        %v608 = vpop.permute.xlu0 %607
        %609 = vrot.lane.b32.xlu0 %v589, 16
        %v610 = vpop.permute.xlu0 %609
        %v611 = vsel %vm594, %v608, %v610
        %v612 = vsel %vm594, %v610, %v608
        %v613 = vmul.f32 %v396, %v612
        %v614 = vmul.f32 %v397, %v611
        %615 = vrot.lane.b32.xlu0 %v579, 112
        %v616 = vpop.permute.xlu0 %615
        %617 = vrot.lane.b32.xlu0 %v580, 112
        %v618 = vpop.permute.xlu0 %617
        %vm619 = vcmp.lt.s32.totalorder %v360, 112
        %v620 = vsel %vm619, %v616, %v618
        %v621 = vsel %vm619, %v618, %v616
        %v622 = vmul.f32 %v400, %v620
        %v623 = vmul.f32 %v401, %v621
        %624 = vrot.lane.b32.xlu0 %v564, 112
        %v625 = vpop.permute.xlu0 %624
        %626 = vrot.lane.b32.xlu0 %v565, 112
        %v627 = vpop.permute.xlu0 %626
        %v628 = vsel %vm619, %v625, %v627
        %v629 = vsel %vm619, %v627, %v625
        %v630 = vmul.f32 %v400, %v628
        %v631 = vmul.f32 %v401, %v629
        %632 = vrot.lane.b32.xlu0 %v588, 112
        %v633 = vpop.permute.xlu0 %632
        %634 = vrot.lane.b32.xlu0 %v589, 112
        %v635 = vpop.permute.xlu0 %634
        %v636 = vsel %vm619, %v633, %v635
        %v637 = vsel %vm619, %v635, %v633
        %v638 = vmul.f32 %v400, %v636
        %v639 = vmul.f32 %v401, %v637
        %v640 = vpack.c.bf16 %v605, %v597
        %v641 = vpack.c.bf16 %v606, %v598
        %v642 = vpack.c.bf16 %v579, %v613
        %v643 = vpack.c.bf16 %v580, %v614
        %v644 = vpack.c.bf16 %v588, %v564
        %v645 = vpack.c.bf16 %v589, %v565
        %v646 = vpack.c.bf16 %v630, %v622
        %v647 = vpack.c.bf16 %v631, %v623
        %v648 = vpack.c.bf16 %v638, %v638
        %v649 = vpack.c.bf16 %v639, %v639
        %v650 = vld [vmem:[%s4] sm:$0xf]
        %vm651 = vcmask 588800
        %v653 = vsel %vm651, %v650, 0
        %vm655 = vcmask 1043456
        %v657 = vsel %vm655, %v648, 0
        %v660 = vsel %vm655, %v649, 0
        %662 = vmatprep.subr.bf16.mxu0 %v641
        %663 = vmatpush1.bf16.msra.mxu0 %v640
        %664 = vmatprep.subr.bf16.mxu0 %v643
        %665 = vmatpush1.bf16.msra.mxu0 %v642
        %666 = vmatprep.subr.bf16.mxu0 %v645
        %667 = vmatpush1.bf16.msra.mxu0 %v644
        %668 = vmatprep.subr.bf16.mxu0 %v647
        %669 = vmatpush1.bf16.msra.mxu0 %v646
        %670 = vmatprep.subr.bf16.mxu0 %v660
        %671 = vmatpush1.bf16.msra.mxu0 %v657
        %672 = vmatprep.subr.bf16.mxu0 0
        %673 = vmatpush1.bf16.msra.mxu0 0
        %674 = vmatprep.subr.bf16.mxu0 0
        %675 = vmatpush1.bf16.msra.mxu0 0
        %676 = vmatprep.subr.bf16.mxu0 0
        %677 = vmatpush1.bf16.msra.mxu0 0
        %678 = vmatprep.subr.bf16.mxu0 0
        %679 = vmatpush1.bf16.msra.mxu0 0
        %680 = vmatprep.subr.bf16.mxu0 0
        %681 = vmatpush1.bf16.msra.mxu0 0
        %682 = vmatprep.subr.bf16.mxu0 0
        %683 = vmatpush1.bf16.msra.mxu0 0
        %684 = vmatprep.subr.bf16.mxu0 0
        %685 = vmatpush1.bf16.msra.mxu0 0
        %686 = vmatprep.subr.bf16.mxu0 0
        %687 = vmatpush1.bf16.msra.mxu0 0
        %688 = vmatprep.subr.bf16.mxu0 0
        %689 = vmatpush1.bf16.msra.mxu0 0
        %690 = vmatprep.subr.bf16.mxu0 0
        %691 = vmatpush1.bf16.msra.mxu0 0
        %692 = vmatprep.subr.bf16.mxu0 0
        %693 = vmatpush1.bf16.msra.mxu0 0
        %694 = vmatprep.mubr.bf16.mxu0 0
        %695 = vmatmul.mubr.bf16.gmra.mrb[0].mxu0 %v653
        %v696 = vpop.f32.mrb[0].mxu0
        %v697 = vadd.f32 0.0, %v696
        %v698 = vpop.f32.mrb[0].mxu0
        %v699 = vadd.f32 0.0, %v698
        %v700 = vpop.f32.mrb[0].mxu0
        %v701 = vpop.f32.mrb[0].mxu0
        %702 = vdwg.mxu0
        %v703 = vld [vmem:[%s5] sm:$0xff]
        %705 = vset.pattern.permute.xlu0 0
        %706 = vperm.xlu0 %705, %v703
        %v707 = vpop.permute.xlu0 %706
        %v709 = vmul.f32 %v697, %v707
        %v710 = vmul.f32 %v699, %v707
        %v711 = vld [vmem:[%s6] sm:$0xff]
        %713 = vset.pattern.permute.xlu0 0
        %714 = vperm.xlu0 %713, %v711
        %v715 = vpop.permute.xlu0 %714
        %v717 = vadd.f32 %v709, %v715
        %v718 = vadd.f32 %v710, %v715
        %v719 = vmax.f32 %v717, 0.0
        %v720 = vmax.f32 %v718, 0.0
        %v721 = vadd.f32 %v719, %v566
        %v722 = vadd.f32 %v720, %v567
        %723 = vrot.lane.b32.xlu0 %v721, 1
        %v724 = vpop.permute.xlu0 %723
        %725 = vrot.lane.b32.xlu0 %v722, 1
        %v726 = vpop.permute.xlu0 %725
        %v727 = vsel %vm576, %v724, %v726
        %v728 = vsel %vm576, %v726, %v724
        %v729 = vmul.f32 %v388, %v728
        %v730 = vmul.f32 %v389, %v727
        %731 = vrot.lane.b32.xlu0 %v721, 127
        %v732 = vpop.permute.xlu0 %731
        %733 = vrot.lane.b32.xlu0 %v722, 127
        %v734 = vpop.permute.xlu0 %733
        %v735 = vsel %vm585, %v732, %v734
        %v736 = vsel %vm585, %v734, %v732
        %v737 = vmul.f32 %v392, %v735
        %v738 = vmul.f32 %v393, %v736
        %739 = vrot.lane.b32.xlu0 %v729, 16
        %v740 = vpop.permute.xlu0 %739
        %741 = vrot.lane.b32.xlu0 %v730, 16
        %v742 = vpop.permute.xlu0 %741
        %v743 = vsel %vm594, %v740, %v742
        %v744 = vsel %vm594, %v742, %v740
        %v745 = vmul.f32 %v396, %v744
        %v746 = vmul.f32 %v397, %v743
        %747 = vrot.lane.b32.xlu0 %v721, 16
        %v748 = vpop.permute.xlu0 %747
        %749 = vrot.lane.b32.xlu0 %v722, 16
        %v750 = vpop.permute.xlu0 %749
        %v751 = vsel %vm594, %v748, %v750
        %v752 = vsel %vm594, %v750, %v748
        %v753 = vmul.f32 %v396, %v752
        %v754 = vmul.f32 %v397, %v751
        %755 = vrot.lane.b32.xlu0 %v737, 16
        %v756 = vpop.permute.xlu0 %755
        %757 = vrot.lane.b32.xlu0 %v738, 16
        %v758 = vpop.permute.xlu0 %757
        %v759 = vsel %vm594, %v756, %v758
        %v760 = vsel %vm594, %v758, %v756
        %v761 = vmul.f32 %v396, %v760
        %v762 = vmul.f32 %v397, %v759
        %763 = vrot.lane.b32.xlu0 %v729, 112
        %v764 = vpop.permute.xlu0 %763
        %765 = vrot.lane.b32.xlu0 %v730, 112
        %v766 = vpop.permute.xlu0 %765
        %v767 = vsel %vm619, %v764, %v766
        %v768 = vsel %vm619, %v766, %v764
        %v769 = vmul.f32 %v400, %v767
        %v770 = vmul.f32 %v401, %v768
        %771 = vrot.lane.b32.xlu0 %v721, 112
        %v772 = vpop.permute.xlu0 %771
        %773 = vrot.lane.b32.xlu0 %v722, 112
        %v774 = vpop.permute.xlu0 %773
        %v775 = vsel %vm619, %v772, %v774
        %v776 = vsel %vm619, %v774, %v772
        %v777 = vmul.f32 %v400, %v775
        %v778 = vmul.f32 %v401, %v776
        %779 = vrot.lane.b32.xlu0 %v737, 112
        %v780 = vpop.permute.xlu0 %779
        %781 = vrot.lane.b32.xlu0 %v738, 112
        %v782 = vpop.permute.xlu0 %781
        %v783 = vsel %vm619, %v780, %v782
        %v784 = vsel %vm619, %v782, %v780
        %v785 = vmul.f32 %v400, %v783
        %v786 = vmul.f32 %v401, %v784
        %v787 = vpack.c.bf16 %v753, %v745
        %v788 = vpack.c.bf16 %v754, %v746
        %v789 = vpack.c.bf16 %v729, %v761
        %v790 = vpack.c.bf16 %v730, %v762
        %v791 = vpack.c.bf16 %v737, %v721
        %v792 = vpack.c.bf16 %v738, %v722
        %v793 = vpack.c.bf16 %v777, %v769
        %v794 = vpack.c.bf16 %v778, %v770
        %v795 = vpack.c.bf16 %v785, %v785
        %v796 = vpack.c.bf16 %v786, %v786
        %s797 = scalar_lea.vmem %s4, 4
        %v798 = vld [vmem:[%s797] sm:$0xf]
        %v800 = vsel %vm651, %v798, 0
        %v803 = vsel %vm655, %v795, 0
        %v806 = vsel %vm655, %v796, 0
        %808 = vmatprep.subr.bf16.mxu0 %v788
        %809 = vmatpush1.bf16.msra.mxu0 %v787
        %810 = vmatprep.subr.bf16.mxu0 %v790
        %811 = vmatpush1.bf16.msra.mxu0 %v789
        %812 = vmatprep.subr.bf16.mxu0 %v792
        %813 = vmatpush1.bf16.msra.mxu0 %v791
        %814 = vmatprep.subr.bf16.mxu0 %v794
        %815 = vmatpush1.bf16.msra.mxu0 %v793
        %816 = vmatprep.subr.bf16.mxu0 %v806
        %817 = vmatpush1.bf16.msra.mxu0 %v803
        %818 = vmatprep.subr.bf16.mxu0 0
        %819 = vmatpush1.bf16.msra.mxu0 0
        %820 = vmatprep.subr.bf16.mxu0 0
        %821 = vmatpush1.bf16.msra.mxu0 0
        %822 = vmatprep.subr.bf16.mxu0 0
        %823 = vmatpush1.bf16.msra.mxu0 0
        %824 = vmatprep.subr.bf16.mxu0 0
        %825 = vmatpush1.bf16.msra.mxu0 0
        %826 = vmatprep.subr.bf16.mxu0 0
        %827 = vmatpush1.bf16.msra.mxu0 0
        %828 = vmatprep.subr.bf16.mxu0 0
        %829 = vmatpush1.bf16.msra.mxu0 0
        %830 = vmatprep.subr.bf16.mxu0 0
        %831 = vmatpush1.bf16.msra.mxu0 0
        %832 = vmatprep.subr.bf16.mxu0 0
        %833 = vmatpush1.bf16.msra.mxu0 0
        %834 = vmatprep.subr.bf16.mxu0 0
        %835 = vmatpush1.bf16.msra.mxu0 0
        %836 = vmatprep.subr.bf16.mxu0 0
        %837 = vmatpush1.bf16.msra.mxu0 0
        %838 = vmatprep.subr.bf16.mxu0 0
        %839 = vmatpush1.bf16.msra.mxu0 0
        %840 = vmatprep.mubr.bf16.mxu0 0
        %841 = vmatmul.mubr.bf16.gmra.mrb[0].mxu0 %v800
        %v842 = vpop.f32.mrb[0].mxu0
        %v843 = vadd.f32 0.0, %v842
        %v844 = vpop.f32.mrb[0].mxu0
        %v845 = vadd.f32 0.0, %v844
        %v846 = vpop.f32.mrb[0].mxu0
        %v847 = vpop.f32.mrb[0].mxu0
        %848 = vdwg.mxu0
        %s849 = scalar_lea.vmem %s5, 8
        %v850 = vld [vmem:[%s849] sm:$0xff]
        %852 = vset.pattern.permute.xlu0 0
        %853 = vperm.xlu0 %852, %v850
        %v854 = vpop.permute.xlu0 %853
        %v856 = vmul.f32 %v843, %v854
        %v857 = vmul.f32 %v845, %v854
        %s858 = scalar_lea.vmem %s6, 8
        %v859 = vld [vmem:[%s858] sm:$0xff]
        %861 = vset.pattern.permute.xlu0 0
        %862 = vperm.xlu0 %861, %v859
        %v863 = vpop.permute.xlu0 %862
        %v865 = vadd.f32 %v856, %v863
        %v866 = vadd.f32 %v857, %v863
        %v867 = vmax.f32 %v865, 0.0
        %v868 = vmax.f32 %v866, 0.0
        %v869 = vadd.f32 %v867, %v568
        %v870 = vadd.f32 %v868, %v569
        %871 = vrot.lane.b32.xlu0 %v869, 1
        %v872 = vpop.permute.xlu0 %871
        %873 = vrot.lane.b32.xlu0 %v870, 1
        %v874 = vpop.permute.xlu0 %873
        %v875 = vsel %vm576, %v872, %v874
        %v876 = vsel %vm576, %v874, %v872
        %v877 = vmul.f32 %v388, %v876
        %v878 = vmul.f32 %v389, %v875
        %879 = vrot.lane.b32.xlu0 %v869, 127
        %v880 = vpop.permute.xlu0 %879
        %881 = vrot.lane.b32.xlu0 %v870, 127
        %v882 = vpop.permute.xlu0 %881
        %v883 = vsel %vm585, %v880, %v882
        %v884 = vsel %vm585, %v882, %v880
        %v885 = vmul.f32 %v392, %v883
        %v886 = vmul.f32 %v393, %v884
        %887 = vrot.lane.b32.xlu0 %v877, 16
        %v888 = vpop.permute.xlu0 %887
        %889 = vrot.lane.b32.xlu0 %v878, 16
        %v890 = vpop.permute.xlu0 %889
        %v891 = vsel %vm594, %v888, %v890
        %v892 = vsel %vm594, %v890, %v888
        %v893 = vmul.f32 %v396, %v892
        %v894 = vmul.f32 %v397, %v891
        %895 = vrot.lane.b32.xlu0 %v869, 16
        %v896 = vpop.permute.xlu0 %895
        %897 = vrot.lane.b32.xlu0 %v870, 16
        %v898 = vpop.permute.xlu0 %897
        %v899 = vsel %vm594, %v896, %v898
        %v900 = vsel %vm594, %v898, %v896
        %v901 = vmul.f32 %v396, %v900
        %v902 = vmul.f32 %v397, %v899
        %903 = vrot.lane.b32.xlu0 %v885, 16
        %v904 = vpop.permute.xlu0 %903
        %905 = vrot.lane.b32.xlu0 %v886, 16
        %v906 = vpop.permute.xlu0 %905
        %v907 = vsel %vm594, %v904, %v906
        %v908 = vsel %vm594, %v906, %v904
        %v909 = vmul.f32 %v396, %v908
        %v910 = vmul.f32 %v397, %v907
        %911 = vrot.lane.b32.xlu0 %v877, 112
        %v912 = vpop.permute.xlu0 %911
        %913 = vrot.lane.b32.xlu0 %v878, 112
        %v914 = vpop.permute.xlu0 %913
        %v915 = vsel %vm619, %v912, %v914
        %v916 = vsel %vm619, %v914, %v912
        %v917 = vmul.f32 %v400, %v915
        %v918 = vmul.f32 %v401, %v916
        %919 = vrot.lane.b32.xlu0 %v869, 112
        %v920 = vpop.permute.xlu0 %919
        %921 = vrot.lane.b32.xlu0 %v870, 112
        %v922 = vpop.permute.xlu0 %921
        %v923 = vsel %vm619, %v920, %v922
        %v924 = vsel %vm619, %v922, %v920
        %v925 = vmul.f32 %v400, %v923
        %v926 = vmul.f32 %v401, %v924
        %927 = vrot.lane.b32.xlu0 %v885, 112
        %v928 = vpop.permute.xlu0 %927
        %929 = vrot.lane.b32.xlu0 %v886, 112
        %v930 = vpop.permute.xlu0 %929
        %v931 = vsel %vm619, %v928, %v930
        %v932 = vsel %vm619, %v930, %v928
        %v933 = vmul.f32 %v400, %v931
        %v934 = vmul.f32 %v401, %v932
        %v935 = vpack.c.bf16 %v901, %v893
        %v936 = vpack.c.bf16 %v902, %v894
        %v937 = vpack.c.bf16 %v877, %v909
        %v938 = vpack.c.bf16 %v878, %v910
        %v939 = vpack.c.bf16 %v885, %v869
        %v940 = vpack.c.bf16 %v886, %v870
        %v941 = vpack.c.bf16 %v925, %v917
        %v942 = vpack.c.bf16 %v926, %v918
        %v943 = vpack.c.bf16 %v933, %v933
        %v944 = vpack.c.bf16 %v934, %v934
        %s945 = scalar_lea.vmem %s4, 8
        %v946 = vld [vmem:[%s945] sm:$0xf]
        %v948 = vsel %vm651, %v946, 0
        %v951 = vsel %vm655, %v943, 0
        %v954 = vsel %vm655, %v944, 0
        %956 = vmatprep.subr.bf16.mxu0 %v936
        %957 = vmatpush1.bf16.msra.mxu0 %v935
        %958 = vmatprep.subr.bf16.mxu0 %v938
        %959 = vmatpush1.bf16.msra.mxu0 %v937
        %960 = vmatprep.subr.bf16.mxu0 %v940
        %961 = vmatpush1.bf16.msra.mxu0 %v939
        %962 = vmatprep.subr.bf16.mxu0 %v942
        %963 = vmatpush1.bf16.msra.mxu0 %v941
        %964 = vmatprep.subr.bf16.mxu0 %v954
        %965 = vmatpush1.bf16.msra.mxu0 %v951
        %966 = vmatprep.subr.bf16.mxu0 0
        %967 = vmatpush1.bf16.msra.mxu0 0
        %968 = vmatprep.subr.bf16.mxu0 0
        %969 = vmatpush1.bf16.msra.mxu0 0
        %970 = vmatprep.subr.bf16.mxu0 0
        %971 = vmatpush1.bf16.msra.mxu0 0
        %972 = vmatprep.subr.bf16.mxu0 0
        %973 = vmatpush1.bf16.msra.mxu0 0
        %974 = vmatprep.subr.bf16.mxu0 0
        %975 = vmatpush1.bf16.msra.mxu0 0
        %976 = vmatprep.subr.bf16.mxu0 0
        %977 = vmatpush1.bf16.msra.mxu0 0
        %978 = vmatprep.subr.bf16.mxu0 0
        %979 = vmatpush1.bf16.msra.mxu0 0
        %980 = vmatprep.subr.bf16.mxu0 0
        %981 = vmatpush1.bf16.msra.mxu0 0
        %982 = vmatprep.subr.bf16.mxu0 0
        %983 = vmatpush1.bf16.msra.mxu0 0
        %984 = vmatprep.subr.bf16.mxu0 0
        %985 = vmatpush1.bf16.msra.mxu0 0
        %986 = vmatprep.subr.bf16.mxu0 0
        %987 = vmatpush1.bf16.msra.mxu0 0
        %988 = vmatprep.mubr.bf16.mxu0 0
        %989 = vmatmul.mubr.bf16.gmra.mrb[0].mxu0 %v948
        %v990 = vpop.f32.mrb[0].mxu0
        %v991 = vadd.f32 0.0, %v990
        %v992 = vpop.f32.mrb[0].mxu0
        %v993 = vadd.f32 0.0, %v992
        %v994 = vpop.f32.mrb[0].mxu0
        %v995 = vpop.f32.mrb[0].mxu0
        %996 = vdwg.mxu0
        %s997 = scalar_lea.vmem %s5, 16
        %v998 = vld [vmem:[%s997] sm:$0xff]
        %1000 = vset.pattern.permute.xlu0 0
        %1001 = vperm.xlu0 %1000, %v998
        %v1002 = vpop.permute.xlu0 %1001
        %v1004 = vmul.f32 %v991, %v1002
        %v1005 = vmul.f32 %v993, %v1002
        %s1006 = scalar_lea.vmem %s6, 16
        %v1007 = vld [vmem:[%s1006] sm:$0xff]
        %1009 = vset.pattern.permute.xlu0 0
        %1010 = vperm.xlu0 %1009, %v1007
        %v1011 = vpop.permute.xlu0 %1010
        %v1013 = vadd.f32 %v1004, %v1011
        %v1014 = vadd.f32 %v1005, %v1011
        %v1015 = vmax.f32 %v1013, 0.0
        %v1016 = vmax.f32 %v1014, 0.0
        %v1017 = vpack.c.bf16 %v867, %v719
        %v1018 = vpack.c.bf16 %v868, %v720
        %v1019 = vpack.c.bf16 %v570, %v1015
        %v1020 = vpack.c.bf16 %v571, %v1016
        %v1021 = vld [vmem:[%s7] sm:$0xf]
        %v1022 = vld [vmem:[%s7 + $0x4] sm:$0xf]
        %v1023 = vld [vmem:[%s7 + $0x8] sm:$0xf]
        %v1024 = vld [vmem:[%s7 + $0xc] sm:$0xf]
        %v1025 = vld [vmem:[%s7 + $0x10] sm:$0xf]
        %v1026 = vld [vmem:[%s7 + $0x14] sm:$0xf]
        %v1027 = vld [vmem:[%s7 + $0x18] sm:$0xf]
        %v1028 = vld [vmem:[%s7 + $0x1c] sm:$0xf]
        %v1037 = vunpack.c.l.b16 %v1021
        %v1038 = vunpack.c.l.b16 %v1022
        %v1039 = vunpack.c.l.b16 %v1023
        %v1040 = vunpack.c.l.b16 %v1024
        %v1041 = vunpack.c.l.b16 %v1025
        %v1042 = vunpack.c.l.b16 %v1026
        %v1043 = vunpack.c.l.b16 %v1027
        %v1044 = vunpack.c.l.b16 %v1028
        %v1045 = vpack.c.b16 %v1038, %v1037
        %v1046 = vpack.c.b16 %v1040, %v1039
        %v1047 = vpack.c.b16 %v1042, %v1041
        %v1048 = vpack.c.b16 %v1044, %v1043
        %vm1049 = vcmask 261120
        %v1051 = vsel %vm1049, %v1045, 0
        %v1054 = vsel %vm1049, %v1046, 0
        %v1057 = vsel %vm1049, %v1047, 0
        %v1060 = vsel %vm1049, %v1048, 0
        %1062 = vmatprep.subr.bf16.mxu0 %v1018
        %1063 = vmatpush1.bf16.msra.mxu0 %v1017
        %1064 = vmatprep.subr.bf16.mxu0 %v1020
        %1065 = vmatpush1.bf16.msra.mxu0 %v1019
        %1066 = vmatprep.subr.bf16.mxu0 0
        %1067 = vmatpush1.bf16.msra.mxu0 0
        %1068 = vmatprep.subr.bf16.mxu0 0
        %1069 = vmatpush1.bf16.msra.mxu0 0
        %1070 = vmatprep.subr.bf16.mxu0 0
        %1071 = vmatpush1.bf16.msra.mxu0 0
        %1072 = vmatprep.subr.bf16.mxu0 0
        %1073 = vmatpush1.bf16.msra.mxu0 0
        %1074 = vmatprep.subr.bf16.mxu0 0
        %1075 = vmatpush1.bf16.msra.mxu0 0
        %1076 = vmatprep.subr.bf16.mxu0 0
        %1077 = vmatpush1.bf16.msra.mxu0 0
        %1078 = vmatprep.subr.bf16.mxu0 0
        %1079 = vmatpush1.bf16.msra.mxu0 0
        %1080 = vmatprep.subr.bf16.mxu0 0
        %1081 = vmatpush1.bf16.msra.mxu0 0
        %1082 = vmatprep.subr.bf16.mxu0 0
        %1083 = vmatpush1.bf16.msra.mxu0 0
        %1084 = vmatprep.subr.bf16.mxu0 0
        %1085 = vmatpush1.bf16.msra.mxu0 0
        %1086 = vmatprep.subr.bf16.mxu0 0
        %1087 = vmatpush1.bf16.msra.mxu0 0
        %1088 = vmatprep.subr.bf16.mxu0 0
        %1089 = vmatpush1.bf16.msra.mxu0 0
        %1090 = vmatprep.subr.bf16.mxu0 0
        %1091 = vmatpush1.bf16.msra.mxu0 0
        %1092 = vmatprep.subr.bf16.mxu0 0
        %1093 = vmatpush1.bf16.msra.mxu0 0
        %1094 = vmatprep.mubr.bf16.mxu0 0
        %1095 = vmatmul.mubr.bf16.gmra.mrb[0].mxu0 %v1051
        %v1096 = vpop.f32.mrb[0].mxu0
        %v1097 = vadd.f32 0.0, %v1096
        %v1098 = vpop.f32.mrb[0].mxu0
        %v1099 = vadd.f32 0.0, %v1098
        %v1100 = vpop.f32.mrb[0].mxu0
        %v1101 = vadd.f32 0.0, %v1100
        %v1102 = vpop.f32.mrb[0].mxu0
        %v1103 = vadd.f32 0.0, %v1102
        %1104 = vmatprep.mubr.bf16.mxu0 0
        %1105 = vmatmul.mubr.bf16.gmra.mrb[0].mxu0 %v1054
        %v1106 = vpop.f32.mrb[0].mxu0
        %v1107 = vadd.f32 0.0, %v1106
        %v1108 = vpop.f32.mrb[0].mxu0
        %v1109 = vadd.f32 0.0, %v1108
        %v1110 = vpop.f32.mrb[0].mxu0
        %v1111 = vadd.f32 0.0, %v1110
        %v1112 = vpop.f32.mrb[0].mxu0
        %v1113 = vadd.f32 0.0, %v1112
        %1114 = vmatprep.mubr.bf16.mxu0 0
        %1115 = vmatmul.mubr.bf16.gmra.mrb[0].mxu0 %v1057
        %v1116 = vpop.f32.mrb[0].mxu0
        %v1117 = vadd.f32 0.0, %v1116
        %v1118 = vpop.f32.mrb[0].mxu0
        %v1119 = vadd.f32 0.0, %v1118
        %v1120 = vpop.f32.mrb[0].mxu0
        %v1121 = vadd.f32 0.0, %v1120
        %v1122 = vpop.f32.mrb[0].mxu0
        %v1123 = vadd.f32 0.0, %v1122
        %1124 = vmatprep.mubr.bf16.mxu0 0
        %1125 = vmatmul.mubr.bf16.gmra.mrb[0].mxu0 %v1060
        %v1126 = vpop.f32.mrb[0].mxu0
        %v1127 = vadd.f32 0.0, %v1126
        %v1128 = vpop.f32.mrb[0].mxu0
        %v1129 = vadd.f32 0.0, %v1128
        %v1130 = vpop.f32.mrb[0].mxu0
        %v1131 = vadd.f32 0.0, %v1130
        %v1132 = vpop.f32.mrb[0].mxu0
        %v1133 = vadd.f32 0.0, %v1132
        %1134 = vdwg.mxu0
        %v1135 = vld [vmem:[%s8] sm:$0xff]
        %v1136 = vld [vmem:[%s8 + $0x8] sm:$0xff]
        %v1137 = vld [vmem:[%s8 + $0x10] sm:$0xff]
        %v1138 = vld [vmem:[%s8 + $0x18] sm:$0xff]
        %v1139 = vld [vmem:[%s8 + $0x20] sm:$0xff]
        %v1140 = vld [vmem:[%s8 + $0x28] sm:$0xff]
        %v1141 = vld [vmem:[%s8 + $0x30] sm:$0xff]
        %v1142 = vld [vmem:[%s8 + $0x38] sm:$0xff]
        %1144 = vset.pattern.permute.xlu0 0
        %1145 = vperm.xlu0 %1144, %v1135
        %v1146 = vpop.permute.xlu0 %1145
        %1149 = vset.pattern.permute.xlu0 0
        %1150 = vperm.xlu0 %1149, %v1136
        %v1151 = vpop.permute.xlu0 %1150
        %1154 = vset.pattern.permute.xlu0 0
        %1155 = vperm.xlu0 %1154, %v1137
        %v1156 = vpop.permute.xlu0 %1155
        %1159 = vset.pattern.permute.xlu0 0
        %1160 = vperm.xlu0 %1159, %v1138
        %v1161 = vpop.permute.xlu0 %1160
        %1164 = vset.pattern.permute.xlu0 0
        %1165 = vperm.xlu0 %1164, %v1139
        %v1166 = vpop.permute.xlu0 %1165
        %1169 = vset.pattern.permute.xlu0 0
        %1170 = vperm.xlu0 %1169, %v1140
        %v1171 = vpop.permute.xlu0 %1170
        %1174 = vset.pattern.permute.xlu0 0
        %1175 = vperm.xlu0 %1174, %v1141
        %v1176 = vpop.permute.xlu0 %1175
        %1179 = vset.pattern.permute.xlu0 0
        %1180 = vperm.xlu0 %1179, %v1142
        %v1181 = vpop.permute.xlu0 %1180
        %v1183 = vmul.f32 %v1097, %v1146
        %v1184 = vmul.f32 %v1099, %v1146
        %v1185 = vmul.f32 %v1101, %v1151
        %v1186 = vmul.f32 %v1103, %v1151
        %v1187 = vmul.f32 %v1107, %v1156
        %v1188 = vmul.f32 %v1109, %v1156
        %v1189 = vmul.f32 %v1111, %v1161
        %v1190 = vmul.f32 %v1113, %v1161
        %v1191 = vmul.f32 %v1117, %v1166
        %v1192 = vmul.f32 %v1119, %v1166
        %v1193 = vmul.f32 %v1121, %v1171
        %v1194 = vmul.f32 %v1123, %v1171
        %v1195 = vmul.f32 %v1127, %v1176
        %v1196 = vmul.f32 %v1129, %v1176
        %v1197 = vmul.f32 %v1131, %v1181
        %v1198 = vmul.f32 %v1133, %v1181
        %v1199 = vld [vmem:[%s9] sm:$0xff]
        %v1200 = vld [vmem:[%s9 + $0x8] sm:$0xff]
        %v1201 = vld [vmem:[%s9 + $0x10] sm:$0xff]
        %v1202 = vld [vmem:[%s9 + $0x18] sm:$0xff]
        %v1203 = vld [vmem:[%s9 + $0x20] sm:$0xff]
        %v1204 = vld [vmem:[%s9 + $0x28] sm:$0xff]
        %v1205 = vld [vmem:[%s9 + $0x30] sm:$0xff]
        %v1206 = vld [vmem:[%s9 + $0x38] sm:$0xff]
        %1208 = vset.pattern.permute.xlu0 0
        %1209 = vperm.xlu0 %1208, %v1199
        %v1210 = vpop.permute.xlu0 %1209
        %1213 = vset.pattern.permute.xlu0 0
        %1214 = vperm.xlu0 %1213, %v1200
        %v1215 = vpop.permute.xlu0 %1214
        %1218 = vset.pattern.permute.xlu0 0
        %1219 = vperm.xlu0 %1218, %v1201
        %v1220 = vpop.permute.xlu0 %1219
        %1223 = vset.pattern.permute.xlu0 0
        %1224 = vperm.xlu0 %1223, %v1202
        %v1225 = vpop.permute.xlu0 %1224
        %1228 = vset.pattern.permute.xlu0 0
        %1229 = vperm.xlu0 %1228, %v1203
        %v1230 = vpop.permute.xlu0 %1229
        %1233 = vset.pattern.permute.xlu0 0
        %1234 = vperm.xlu0 %1233, %v1204
        %v1235 = vpop.permute.xlu0 %1234
        %1238 = vset.pattern.permute.xlu0 0
        %1239 = vperm.xlu0 %1238, %v1205
        %v1240 = vpop.permute.xlu0 %1239
        %1243 = vset.pattern.permute.xlu0 0
        %1244 = vperm.xlu0 %1243, %v1206
        %v1245 = vpop.permute.xlu0 %1244
        %v1247 = vadd.f32 %v1183, %v1210
        %v1248 = vadd.f32 %v1184, %v1210
        %v1249 = vadd.f32 %v1185, %v1215
        %v1250 = vadd.f32 %v1186, %v1215
        %v1251 = vadd.f32 %v1187, %v1220
        %v1252 = vadd.f32 %v1188, %v1220
        %v1253 = vadd.f32 %v1189, %v1225
        %v1254 = vadd.f32 %v1190, %v1225
        %v1255 = vadd.f32 %v1191, %v1230
        %v1256 = vadd.f32 %v1192, %v1230
        %v1257 = vadd.f32 %v1193, %v1235
        %v1258 = vadd.f32 %v1194, %v1235
        %v1259 = vadd.f32 %v1195, %v1240
        %v1260 = vadd.f32 %v1196, %v1240
        %v1261 = vadd.f32 %v1197, %v1245
        %v1262 = vadd.f32 %v1198, %v1245
        %v1263 = vadd.f32 %v1247, %v402
        %v1264 = vadd.f32 %v1248, %v403
        %v1265 = vadd.f32 %v1249, %v404
        %v1266 = vadd.f32 %v1250, %v405
        %v1267 = vadd.f32 %v1251, %v406
        %v1268 = vadd.f32 %v1252, %v407
        %v1269 = vadd.f32 %v1253, %v408
        %v1270 = vadd.f32 %v1254, %v409
        %v1271 = vadd.f32 %v1255, %v410
        %v1272 = vadd.f32 %v1256, %v411
        %v1273 = vadd.f32 %v1257, %v412
        %v1274 = vadd.f32 %v1258, %v413
        %v1275 = vadd.f32 %v1259, %v414
        %v1276 = vadd.f32 %v1260, %v415
        %v1277 = vadd.f32 %v1261, %v416
        %v1278 = vadd.f32 %v1262, %v417
        %v1279 = vmax.f32 %v1263, 0.0
        %v1280 = vmax.f32 %v1264, 0.0
        %v1281 = vmax.f32 %v1265, 0.0
        %v1282 = vmax.f32 %v1266, 0.0
        %v1283 = vmax.f32 %v1267, 0.0
        %v1284 = vmax.f32 %v1268, 0.0
        %v1285 = vmax.f32 %v1269, 0.0
        %v1286 = vmax.f32 %v1270, 0.0
        %v1287 = vmax.f32 %v1271, 0.0
        %v1288 = vmax.f32 %v1272, 0.0
        %v1289 = vmax.f32 %v1273, 0.0
        %v1290 = vmax.f32 %v1274, 0.0
        %v1291 = vmax.f32 %v1275, 0.0
        %v1292 = vmax.f32 %v1276, 0.0
        %v1293 = vmax.f32 %v1277, 0.0
        %v1294 = vmax.f32 %v1278, 0.0
        %1295 = vst [vmem:[%s352] sm:$0xff] %v1279
        %1296 = vst [vmem:[%s352 + $0x8] sm:$0xff] %v1280
        %1297 = vst [vmem:[%s352 + $0x10] sm:$0xff] %v1281
        %1298 = vst [vmem:[%s352 + $0x18] sm:$0xff] %v1282
        %1299 = vst [vmem:[%s352 + $0x20] sm:$0xff] %v1283
        %1300 = vst [vmem:[%s352 + $0x28] sm:$0xff] %v1284
        %1301 = vst [vmem:[%s352 + $0x30] sm:$0xff] %v1285
        %1302 = vst [vmem:[%s352 + $0x38] sm:$0xff] %v1286
        %1303 = vst [vmem:[%s352 + $0x40] sm:$0xff] %v1287
        %1304 = vst [vmem:[%s352 + $0x48] sm:$0xff] %v1288
        %1305 = vst [vmem:[%s352 + $0x50] sm:$0xff] %v1289
        %1306 = vst [vmem:[%s352 + $0x58] sm:$0xff] %v1290
        %1307 = vst [vmem:[%s352 + $0x60] sm:$0xff] %v1291
        %1308 = vst [vmem:[%s352 + $0x68] sm:$0xff] %v1292
        %1309 = vst [vmem:[%s352 + $0x70] sm:$0xff] %v1293
        %1310 = vst [vmem:[%s352 + $0x78] sm:$0xff] %v1294
        %s1311 = sand.u32 %s247, 1
        %s1312 = scalar_lea.sflag [#allocation3], %s1311
        %s1313 = sand.u32 %s247, 1
        %s1314 = smul.addr %s1313, 128
        %s1315 = scalar_lea.vmem [#allocation2], %s1314
        // Predicated region
        $region61: #{tpu_custom_call.1} parent=59 // pred_check
          %p1316 = pneg %p257
        $region62: #{tpu_custom_call.1} parent=59 // pred_check_branch
          %1318 = sbr.rel (%p1316) target = $region64
        $region63: #{tpu_custom_call.1} parent=59 // pred_region
          %s1320 = ssub.s32 2048, 2048
          %1321 = vsyncadd %s1312, %s1320
          %s1322 = smul.addr %s24, 16
          %s1323 = smul.addr %s1322, 128
          %s1324 = scalar_lea.hbm %s10, %s1323
          %s1325 = sshll.u32 %s1315, 4
          %s1326 = int_to_ptr.vmem [resolvable:$true] %s1325
          %1331 = dma.vmem_to_hbm [thread:$0]  %s1326, 2048, %s1324, %s1312, 256, 256, 16
        $region64: #{tpu_custom_call.1} parent=59 // pred_fallthru
          _
      $region60: #{tpu_custom_call.1} parent=5 // pred_fallthru
        _
      %p1332 = scmp.le.s32.totalorder 2, %s19
      // Predicated region
      $region65: #{tpu_custom_call.1} parent=5 // pred_check
        %p1333 = pneg %p1332
      $region66: #{tpu_custom_call.1} parent=5 // pred_check_branch
        %1335 = sbr.rel (%p1333) target = $region68
      $region67: #{tpu_custom_call.1} parent=5 // pred_region
        %s1336 = ssub.s32 %s19, 2
        // Predicated region
        $region69: #{tpu_custom_call.1} parent=67 // pred_check
          %p1337 = pneg %p263
        $region70: #{tpu_custom_call.1} parent=67 // pred_check_branch
          %1339 = sbr.rel (%p1337) target = $region72
        $region71: #{tpu_custom_call.1} parent=67 // pred_region
          %s1340 = sand.u32 %s248, 1
          %s1341 = scalar_lea.sflag [#allocation3], %s1340
          %s1342 = sand.u32 %s248, 1
          %s1343 = smul.addr %s1342, 128
          %s1344 = scalar_lea.vmem [#allocation2], %s1343
          %1345 = dma.done %s1341, 2048
        $region72: #{tpu_custom_call.1} parent=67 // pred_fallthru
          _
      $region68: #{tpu_custom_call.1} parent=5 // pred_fallthru
        _
    $region6: #{tpu_custom_call.1} parent=1 // loop_footer
      %s23 = sadd.s32 1, %s19
    $region7: #{tpu_custom_call.1} parent=1 // loop_footer_branch
      %18 = sbr.rel target = $region3
    $region8: #{tpu_custom_call.1} parent=1 // loop_exit
      _
    %1346 = vsyncpa [#allocation3], 1
    %s1347 = scalar_lea.sflag [#allocation3], 1
    %1348 = vsyncpa %s1347, 1

</llo_original>
